<compile_context>
chip_gen: v6e
topology: v6e:2x2x1
jax: 0.10.0
libtpu: 0.0.40
codegen_flags: <defaults>
</compile_context>

<pallas_src>
import functools

import jax
import jax.numpy as jnp
from jax.experimental import pallas as pl
from jax.experimental.pallas import tpu as pltpu

# ---------------- config (small shapes) ----------------
IMG_H, IMG_W = 32, 32          # dataset_imgH / imgW
D_MODEL = 128                  # model_d_model (scaled down from 512)
MAX_LENGTH = 8                 # dataset_max_length
T = MAX_LENGTH + 1             # decoder length (9)
NUM_CLASSES = 40               # charset.num_classes
NULL_LABEL = 0                 # charset.null_label
ATTN_C = D_MODEL // 4          # PositionAttention num_channels
PROJ_HIDDEN = 4 * D_MODEL      # Projection(512, 2048, 512) scaled: 128 -> 512 -> 128
PATCH = 8                      # /8 downsample of the backbone
L = (IMG_H // PATCH) * (IMG_W // PATCH)   # 16 spatial tokens
PATCH_DIM = 3 * PATCH * PATCH             # 192
LOSS_WEIGHT = 1.0

# padding for sublane/lane density (sliced off in the wrapper)
T_PAD = 16                     # 9 -> 16 (full sublane packing, 128 rows at B_TILE=8)
CLS_PAD = 128                  # 40 -> 128 lane-dense logits
VEC_W = 2 * D_MODEL + 2 * PROJ_HIDDEN     # packed 1-row vectors: 1280 lanes

# 8 images -> 128 GEMM rows (fills the MXU row tile on v5e; can be raised to 16
# on v6e/v7x for large batches while keeping >= 2 grid steps for both TCs).
B_TILE_MAX = 8


# ---------------- fused forward kernel ----------------
def _fused_forward_kernel(patch_ref, pw_ref, qeff_ref, clsw_ref, w1_ref, w2_ref,
                          packed_ref,
                          vec_ref, score_ref, logit_ref, con_ref, *, b_tile):
    f32 = jnp.float32
    bf16 = jnp.bfloat16

    # packed bias / affine vectors (static lane-aligned slices of one resident row)
    patch_b = packed_ref[:, 0:D_MODEL]                                  # [1, 128]
    cls_b = packed_ref[:, D_MODEL:2 * D_MODEL]                          # [1, 128]
    ln_g = packed_ref[:, 2 * D_MODEL:2 * D_MODEL + PROJ_HIDDEN]         # [1, 512]
    ln_b = packed_ref[:, 2 * D_MODEL + PROJ_HIDDEN:VEC_W]               # [1, 512]

    # --- backbone stand-in: 8x8 patch embedding over b_tile images at once ---
    x = patch_ref[...]                                                  # [b_tile*L, PATCH_DIM] bf16
    feat = jnp.dot(x, pw_ref[...], preferred_element_type=f32) + patch_b
    feat_bf = feat.astype(bf16)                                         # [b_tile*L, D]
    feat3 = feat_bf.reshape(b_tile, L, D_MODEL)

    # --- position-attention decoder ---
    # q_eff = (pos @ Wq + bq) @ Wk^T * (1/sqrt(C)) is precomputed in the wrapper
    # (batch-invariant); the key bias bk adds a per-row constant that cancels in
    # the softmax, so s = q_eff @ feat^T gives identical attention scores.
    q_b = jnp.broadcast_to(qeff_ref[...], (b_tile, T_PAD, D_MODEL))     # bf16
    s = jnp.einsum('btd,bld->btl', q_b, feat3,
                   preferred_element_type=f32)                          # [b_tile, T_PAD, L]
    m = jnp.max(s, axis=-1, keepdims=True)
    e = jnp.exp(s - m)
    p = e / jnp.sum(e, axis=-1, keepdims=True)                          # exact softmax
    score_ref[...] = p.astype(score_ref.dtype)

    attn = jnp.einsum('btl,bld->btd', p.astype(bf16), feat3,
                      preferred_element_type=f32)                       # [b_tile, T_PAD, D]
    vec_ref[...] = attn.astype(vec_ref.dtype)

    attn_flat = attn.reshape(b_tile * T_PAD, D_MODEL).astype(bf16)      # M = b_tile*T_PAD rows

    # --- classifier (weights lane-padded to 128 classes; zeros beyond NUM_CLASSES) ---
    logits = jnp.dot(attn_flat, clsw_ref[...], preferred_element_type=f32) + cls_b
    logit_ref[...] = logits.reshape(b_tile, T_PAD, CLS_PAD).astype(logit_ref.dtype)

    # --- SimCLR projection head: Linear(no bias) -> LayerNorm -> ReLU -> Linear -> L2 ---
    h = jnp.dot(attn_flat, w1_ref[...], preferred_element_type=f32)     # [M, PROJ_HIDDEN]
    mu = jnp.mean(h, axis=-1, keepdims=True)
    var = jnp.mean(jnp.square(h - mu), axis=-1, keepdims=True)
    h = (h - mu) * jax.lax.rsqrt(var + 1e-5)
    h = h * ln_g + ln_b
    h = jnp.maximum(h, 0.0)
    y = jnp.dot(h.astype(bf16), w2_ref[...], preferred_element_type=f32)  # [M, D]
    # F.normalize(x, dim=1):  x / max(||x||, 1e-12)  ==  x * rsqrt(max(sum_sq, 1e-24))
    inv_n = jax.lax.rsqrt(jnp.maximum(jnp.sum(y * y, axis=-1, keepdims=True), 1e-24))
    con_ref[...] = (y * inv_n).reshape(b_tile, T_PAD, D_MODEL).astype(con_ref.dtype)


def _choose_b_tile(batch):
    """Largest tile <= B_TILE_MAX that still leaves >= 2 grid steps when possible."""
    bt = B_TILE_MAX
    while bt > 1 and batch < 2 * bt:
        bt //= 2
    return max(1, bt)


def fused_forward(params, patches):
    """patches: [B, L, PATCH_DIM].  Returns padded (attn_vecs, scores, logits, con)."""
    B = patches.shape[0]
    bt = _choose_b_tile(B)
    B_pad = ((B + bt - 1) // bt) * bt
    n_steps = B_pad // bt
    bf16 = jnp.bfloat16
    f32 = jnp.float32

    if B_pad != B:
        patches = jnp.pad(patches, ((0, B_pad - B), (0, 0), (0, 0)))
    patches_flat = patches.reshape(B_pad * L, PATCH_DIM).astype(bf16)

    # hoisted batch-invariant query path with the 1/sqrt(C) scale folded in
    pos_pad = jnp.pad(params["pos_emb"], ((0, T_PAD - T), (0, 0))).astype(f32)
    scale = 1.0 / (ATTN_C ** 0.5)
    q = pos_pad @ params["wq"] + params["bq"]                  # [T_PAD, C]
    q_eff = ((q @ params["wk"].T) * scale).astype(bf16)        # [T_PAD, D_MODEL]

    cls_w_pad = jnp.pad(params["cls_w"],
                        ((0, 0), (0, CLS_PAD - NUM_CLASSES))).astype(bf16)
    cls_b_pad = jnp.pad(params["cls_b"], (0, CLS_PAD - NUM_CLASSES))

    # pack the four 1-row vectors into a single lane-aligned resident input
    packed_vec = jnp.concatenate(
        [params["patch_b"], cls_b_pad, params["proj_ln_g"], params["proj_ln_b"]]
    ).reshape(1, VEC_W).astype(f32)

    kern = functools.partial(_fused_forward_kernel, b_tile=bt)
    const2 = lambda b: (0, 0)
    blk3 = lambda b: (b, 0, 0)

    out_shapes = (
        jax.ShapeDtypeStruct((B_pad, T_PAD, D_MODEL), f32),    # attn_vecs
        jax.ShapeDtypeStruct((B_pad, T_PAD, L), f32),          # attn_scores
        jax.ShapeDtypeStruct((B_pad, T_PAD, CLS_PAD), f32),    # logits (lane-padded)
        jax.ShapeDtypeStruct((B_pad, T_PAD, D_MODEL), f32),    # con_feature
    )
    in_specs = [
        pl.BlockSpec((bt * L, PATCH_DIM), lambda b: (b, 0)),   # patches (bt images/step)
        pl.BlockSpec((PATCH_DIM, D_MODEL), const2),            # patch_w
        pl.BlockSpec((T_PAD, D_MODEL), const2),                # q_eff (precomputed)
        pl.BlockSpec((D_MODEL, CLS_PAD), const2),              # cls_w (padded)
        pl.BlockSpec((D_MODEL, PROJ_HIDDEN), const2),          # proj_w1
        pl.BlockSpec((PROJ_HIDDEN, D_MODEL), const2),          # proj_w2
        pl.BlockSpec((1, VEC_W), const2),                      # packed bias/affine vectors
    ]
    out_specs = (
        pl.BlockSpec((bt, T_PAD, D_MODEL), blk3),
        pl.BlockSpec((bt, T_PAD, L), blk3),
        pl.BlockSpec((bt, T_PAD, CLS_PAD), blk3),
        pl.BlockSpec((bt, T_PAD, D_MODEL), blk3),
    )
    vec_p, score_p, logit_p, con_p = pl.pallas_call(
        kern,
        out_shape=out_shapes,
        grid=(n_steps,),
        in_specs=in_specs,
        out_specs=out_specs,
        compiler_params=pltpu.CompilerParams(
            dimension_semantics=("parallel",)),
    )(patches_flat,
      params["patch_w"].astype(bf16),
      q_eff,
      cls_w_pad,
      params["proj_w1"].astype(bf16),
      params["proj_w2"].astype(bf16),
      packed_vec)
    return vec_p[:B], score_p[:B], logit_p[:B], con_p[:B]


# ---------------- parameter init (deterministic, mirrors _init_weights) ----------------
def _trunc_normal(key, shape, std=0.02):
    return std * jax.random.truncated_normal(key, -2.0, 2.0, shape, jnp.float32)


def init_params(key):
    ks = jax.random.split(key, 10)
    return {
        # backbone stand-in (conv-style init: normal(0, sqrt(2/fan_out)))
        "patch_w": jax.random.normal(ks[0], (PATCH_DIM, D_MODEL), jnp.float32)
                   * (2.0 / (PATCH * PATCH * D_MODEL)) ** 0.5,
        "patch_b": jnp.zeros((D_MODEL,), jnp.float32),
        # position-attention decoder stand-in
        "pos_emb": _trunc_normal(ks[1], (T, D_MODEL)),
        "wq": _trunc_normal(ks[2], (D_MODEL, ATTN_C)), "bq": jnp.zeros((ATTN_C,), jnp.float32),
        "wk": _trunc_normal(ks[3], (D_MODEL, ATTN_C)), "bk": jnp.zeros((ATTN_C,), jnp.float32),
        # cls linear
        "cls_w": _trunc_normal(ks[4], (D_MODEL, NUM_CLASSES)),
        "cls_b": jnp.zeros((NUM_CLASSES,), jnp.float32),
        # SimCLR projection head (lin1 has no bias when use_bn=True; lin2 has no bias)
        "proj_w1": _trunc_normal(ks[5], (D_MODEL, PROJ_HIDDEN)),
        "proj_ln_g": jnp.ones((PROJ_HIDDEN,), jnp.float32),
        "proj_ln_b": jnp.zeros((PROJ_HIDDEN,), jnp.float32),
        "proj_w2": _trunc_normal(ks[6], (PROJ_HIDDEN, D_MODEL)),
    }


# ---------------- model forward (glue in plain JAX) ----------------
def _get_length(logits):
    """Greedy decoder to obtain length from logits (mirrors Model._get_length)."""
    out = jnp.argmax(logits, axis=-1) == NULL_LABEL              # [B, T] bool
    abn = jnp.any(out, axis=-1)
    first = jnp.argmax(((jnp.cumsum(out, axis=-1) == 1) & out).astype(jnp.int32), axis=-1)
    first = first + 1
    return jnp.where(abn, first, logits.shape[1])


def _single_image_forward(params, image):
    """image: [B, 3, H, W] (NCHW)."""
    B = image.shape[0]
    # NCHW -> [B, L, 3*8*8] patch extraction (negligible at this size; stays in XLA)
    x = image.reshape(B, 3, IMG_H // PATCH, PATCH, IMG_W // PATCH, PATCH)
    patches = jnp.transpose(x, (0, 2, 4, 1, 3, 5)).reshape(B, L, PATCH_DIM)

    vec_p, score_p, logit_p, con_p = fused_forward(params, patches)

    attn_vecs = vec_p[:, :T, :]
    attn_scores = score_p[:, :T, :]
    logits = logit_p[:, :T, :NUM_CLASSES]
    con = con_p[:, :T, :]
    pt_lengths = _get_length(logits)
    return attn_vecs, attn_scores, logits, pt_lengths, con


def model_forward(params, images):
    """images: [N, 2, 3, H, W] (two augmented views, contrastive training path)."""
    N = images.shape[0]
    img = jnp.concatenate([images[:, 0], images[:, 1]], axis=0)       # [2N, 3, H, W]
    attn_vecs, attn_scores, logits, pt_lengths, con = _single_image_forward(params, img)
    sp = lambda a: (a[:N], a[N:])
    (av1, av2), (as1, as2) = sp(attn_vecs), sp(attn_scores)
    (lg1, lg2), (pl1, pl2), (cf1, cf2) = sp(logits), sp(pt_lengths), sp(con)
    return {
        "outputs_view_1": {"feature": av1, "con_feature_view_1": cf1, "logits": lg1,
                           "pt_lengths": pl1, "attn_score": as1},
        "outputs_view_2": {"feature": av2, "con_feature_view_2": cf2, "logits": lg2,
                           "pt_lengths": pl2, "attn_score": as2},
        "loss_weight": LOSS_WEIGHT,
    }


if __name__ == "__main__":
    key = jax.random.PRNGKey(0)
    k_param, k_img = jax.random.split(key)
    params = init_params(k_param)
    images = jax.random.normal(k_img, (2, 2, 3, IMG_H, IMG_W), jnp.float32)   # [N, views, C, H, W]

    fwd = jax.jit(model_forward)
    out = fwd(params, images)
    out = jax.tree_util.tree_map(jax.block_until_ready, out)

    v1 = out["outputs_view_1"]
    assert v1["feature"].shape == (2, T, D_MODEL)
    assert v1["logits"].shape == (2, T, NUM_CLASSES)
    assert v1["attn_score"].shape == (2, T, L)
    assert v1["con_feature_view_1"].shape == (2, T, D_MODEL)
    assert v1["pt_lengths"].shape == (2,)
    print("KERNEL_OK")
</pallas_src>

<mosaic_0001>
module attributes {stable_mosaic.version = 11 : i64} {
  func.func @_fused_forward_kernel(%arg0: i32, %arg1: memref<32x192xbf16, #tpu.memory_space<vmem>>, %arg2: memref<192x128xbf16, #tpu.memory_space<vmem>>, %arg3: memref<16x128xbf16, #tpu.memory_space<vmem>>, %arg4: memref<128x128xbf16, #tpu.memory_space<vmem>>, %arg5: memref<128x512xbf16, #tpu.memory_space<vmem>>, %arg6: memref<512x128xbf16, #tpu.memory_space<vmem>>, %arg7: memref<1x1280xf32, #tpu.memory_space<vmem>>, %arg8: memref<2x16x128xf32, #tpu.memory_space<vmem>>, %arg9: memref<2x16x16xf32, #tpu.memory_space<vmem>>, %arg10: memref<2x16x128xf32, #tpu.memory_space<vmem>>, %arg11: memref<2x16x128xf32, #tpu.memory_space<vmem>>) attributes {dimension_semantics = [#tpu.dimension_semantics<parallel>], iteration_bounds = array<i64: 2>, scalar_prefetch = 0 : i64, scratch_operands = 0 : i64, tpu.core_type = #tpu.core_type<tc>, window_params = [{transform_indices = @transform_0, window_bounds = array<i64: 32, 192>}, {pipeline_mode = #tpu.pipeline_mode<synchronous>, transform_indices = @transform_1, window_bounds = array<i64: 192, 128>}, {pipeline_mode = #tpu.pipeline_mode<synchronous>, transform_indices = @transform_2, window_bounds = array<i64: 16, 128>}, {pipeline_mode = #tpu.pipeline_mode<synchronous>, transform_indices = @transform_3, window_bounds = array<i64: 128, 128>}, {pipeline_mode = #tpu.pipeline_mode<synchronous>, transform_indices = @transform_4, window_bounds = array<i64: 128, 512>}, {pipeline_mode = #tpu.pipeline_mode<synchronous>, transform_indices = @transform_5, window_bounds = array<i64: 512, 128>}, {pipeline_mode = #tpu.pipeline_mode<synchronous>, transform_indices = @transform_6, window_bounds = array<i64: 1, 1280>}, {transform_indices = @transform_7, window_bounds = array<i64: 2, 16, 128>}, {transform_indices = @transform_8, window_bounds = array<i64: 2, 16, 16>}, {transform_indices = @transform_9, window_bounds = array<i64: 2, 16, 128>}, {transform_indices = @transform_10, window_bounds = array<i64: 2, 16, 128>}]} {
    %c0 = arith.constant 0 : index
    %c0_0 = arith.constant 0 : index
    %0 = vector.load %arg7[%c0, %c0_0] : memref<1x1280xf32, #tpu.memory_space<vmem>>, vector<1x128xf32>
    %c0_1 = arith.constant 0 : index
    %c128 = arith.constant 128 : index
    %1 = vector.load %arg7[%c0_1, %c128] : memref<1x1280xf32, #tpu.memory_space<vmem>>, vector<1x128xf32>
    %c0_2 = arith.constant 0 : index
    %c256 = arith.constant 256 : index
    %2 = vector.load %arg7[%c0_2, %c256] : memref<1x1280xf32, #tpu.memory_space<vmem>>, vector<1x512xf32>
    %c0_3 = arith.constant 0 : index
    %c768 = arith.constant 768 : index
    %3 = vector.load %arg7[%c0_3, %c768] : memref<1x1280xf32, #tpu.memory_space<vmem>>, vector<1x512xf32>
    %c0_4 = arith.constant 0 : index
    %c0_5 = arith.constant 0 : index
    %4 = vector.load %arg1[%c0_4, %c0_5] : memref<32x192xbf16, #tpu.memory_space<vmem>>, vector<32x192xbf16>
    %c0_6 = arith.constant 0 : index
    %c0_7 = arith.constant 0 : index
    %5 = vector.load %arg2[%c0_6, %c0_7] : memref<192x128xbf16, #tpu.memory_space<vmem>>, vector<192x128xbf16>
    %cst = arith.constant dense<0.000000e+00> : vector<32x128xf32>
    %6 = tpu.matmul %4, %5, %cst {dimension_numbers = #tpu.dot_dimension_numbers<[1], [0], [0], [1], [0, 0, 1, 1], [], []>} : vector<32x192xbf16>, vector<192x128xbf16>, vector<32x128xf32> -> vector<32x128xf32>
    %7 = vector.broadcast %0 : vector<1x128xf32> to vector<32x128xf32>
    %8 = arith.addf %6, %7 : vector<32x128xf32>
    %9 = arith.truncf %8 : vector<32x128xf32> to vector<32x128xbf16>
    %10 = vector.shape_cast %9 : vector<32x128xbf16> to vector<2x16x128xbf16>
    %c0_8 = arith.constant 0 : index
    %c0_9 = arith.constant 0 : index
    %11 = vector.load %arg3[%c0_8, %c0_9] : memref<16x128xbf16, #tpu.memory_space<vmem>>, vector<16x128xbf16>
    %12 = vector.shape_cast %11 : vector<16x128xbf16> to vector<1x16x128xbf16>
    %13 = vector.broadcast %12 : vector<1x16x128xbf16> to vector<2x16x128xbf16>
    "tpu.trace_start"() <{level = 10 : i32, message = "btd,bld->btl"}> : () -> ()
    %cst_10 = arith.constant dense<0.000000e+00> : vector<2x16x16xf32>
    %14 = tpu.matmul %13, %10, %cst_10 {dimension_numbers = #tpu.dot_dimension_numbers<[2], [2], [1], [1], [0, 0, 0, 1, 1, 1], [0], [0]>} : vector<2x16x128xbf16>, vector<2x16x128xbf16>, vector<2x16x16xf32> -> vector<2x16x16xf32>
    "tpu.trace_stop"() : () -> ()
    %cst_11 = arith.constant dense<0xFF800000> : vector<2x16xf32>
    %15 = vector.multi_reduction <maximumf>, %14, %cst_11 [2] : vector<2x16x16xf32> to vector<2x16xf32>
    %16 = vector.shape_cast %15 : vector<2x16xf32> to vector<2x16x1xf32>
    %17 = vector.broadcast %16 : vector<2x16x1xf32> to vector<2x16x16xf32>
    %18 = arith.subf %14, %17 : vector<2x16x16xf32>
    %19 = math.exp %18 : vector<2x16x16xf32>
    %cst_12 = arith.constant dense<0.000000e+00> : vector<2x16xf32>
    %20 = vector.multi_reduction <add>, %19, %cst_12 [2] : vector<2x16x16xf32> to vector<2x16xf32>
    %21 = vector.shape_cast %20 : vector<2x16xf32> to vector<2x16x1xf32>
    %22 = vector.broadcast %21 : vector<2x16x1xf32> to vector<2x16x16xf32>
    %23 = arith.divf %19, %22 : vector<2x16x16xf32>
    %c0_13 = arith.constant 0 : index
    %c0_14 = arith.constant 0 : index
    %c0_15 = arith.constant 0 : index
    %24 = vector.load %arg9[%c0_13, %c0_14, %c0_15] : memref<2x16x16xf32, #tpu.memory_space<vmem>>, vector<2x16x16xf32>
    tpu.vector_store %arg9[%c0_13, %c0_14, %c0_15], %23 {strides = array<i32>} : memref<2x16x16xf32, #tpu.memory_space<vmem>>, vector<2x16x16xf32>,
    %25 = arith.truncf %23 : vector<2x16x16xf32> to vector<2x16x16xbf16>
    "tpu.trace_start"() <{level = 10 : i32, message = "btl,bld->btd"}> : () -> ()
    %cst_16 = arith.constant dense<0.000000e+00> : vector<2x16x128xf32>
    %26 = tpu.matmul %25, %10, %cst_16 {dimension_numbers = #tpu.dot_dimension_numbers<[2], [1], [1], [2], [0, 0, 0, 1, 1, 2], [0], [0]>} : vector<2x16x16xbf16>, vector<2x16x128xbf16>, vector<2x16x128xf32> -> vector<2x16x128xf32>
    "tpu.trace_stop"() : () -> ()
    %c0_17 = arith.constant 0 : index
    %c0_18 = arith.constant 0 : index
    %c0_19 = arith.constant 0 : index
    %27 = vector.load %arg8[%c0_17, %c0_18, %c0_19] : memref<2x16x128xf32, #tpu.memory_space<vmem>>, vector<2x16x128xf32>
    tpu.vector_store %arg8[%c0_17, %c0_18, %c0_19], %26 {strides = array<i32>} : memref<2x16x128xf32, #tpu.memory_space<vmem>>, vector<2x16x128xf32>,
    %28 = vector.shape_cast %26 : vector<2x16x128xf32> to vector<32x128xf32>
    %29 = arith.truncf %28 : vector<32x128xf32> to vector<32x128xbf16>
    %c0_20 = arith.constant 0 : index
    %c0_21 = arith.constant 0 : index
    %30 = vector.load %arg4[%c0_20, %c0_21] : memref<128x128xbf16, #tpu.memory_space<vmem>>, vector<128x128xbf16>
    %cst_22 = arith.constant dense<0.000000e+00> : vector<32x128xf32>
    %31 = tpu.matmul %29, %30, %cst_22 {dimension_numbers = #tpu.dot_dimension_numbers<[1], [0], [0], [1], [0, 0, 1, 1], [], []>} : vector<32x128xbf16>, vector<128x128xbf16>, vector<32x128xf32> -> vector<32x128xf32>
    %32 = vector.broadcast %1 : vector<1x128xf32> to vector<32x128xf32>
    %33 = arith.addf %31, %32 : vector<32x128xf32>
    %34 = vector.shape_cast %33 : vector<32x128xf32> to vector<2x16x128xf32>
    %c0_23 = arith.constant 0 : index
    %c0_24 = arith.constant 0 : index
    %c0_25 = arith.constant 0 : index
    %35 = vector.load %arg10[%c0_23, %c0_24, %c0_25] : memref<2x16x128xf32, #tpu.memory_space<vmem>>, vector<2x16x128xf32>
    tpu.vector_store %arg10[%c0_23, %c0_24, %c0_25], %34 {strides = array<i32>} : memref<2x16x128xf32, #tpu.memory_space<vmem>>, vector<2x16x128xf32>,
    %c0_26 = arith.constant 0 : index
    %c0_27 = arith.constant 0 : index
    %36 = vector.load %arg5[%c0_26, %c0_27] : memref<128x512xbf16, #tpu.memory_space<vmem>>, vector<128x512xbf16>
    %cst_28 = arith.constant dense<0.000000e+00> : vector<32x512xf32>
    %37 = tpu.matmul %29, %36, %cst_28 {dimension_numbers = #tpu.dot_dimension_numbers<[1], [0], [0], [1], [0, 0, 1, 1], [], []>} : vector<32x128xbf16>, vector<128x512xbf16>, vector<32x512xf32> -> vector<32x512xf32>
    %cst_29 = arith.constant dense<0.000000e+00> : vector<32xf32>
    %38 = vector.multi_reduction <add>, %37, %cst_29 [1] : vector<32x512xf32> to vector<32xf32>
    %39 = vector.shape_cast %38 : vector<32xf32> to vector<32x1xf32>
    %cst_30 = arith.constant 5.120000e+02 : f32
    %40 = vector.broadcast %cst_30 : f32 to vector<32x1xf32>
    %41 = arith.divf %39, %40 : vector<32x1xf32>
    %42 = vector.broadcast %41 : vector<32x1xf32> to vector<32x512xf32>
    %43 = arith.subf %37, %42 : vector<32x512xf32>
    %44 = arith.mulf %43, %43 : vector<32x512xf32>
    %cst_31 = arith.constant dense<0.000000e+00> : vector<32xf32>
    %45 = vector.multi_reduction <add>, %44, %cst_31 [1] : vector<32x512xf32> to vector<32xf32>
    %46 = vector.shape_cast %45 : vector<32xf32> to vector<32x1xf32>
    %cst_32 = arith.constant 5.120000e+02 : f32
    %47 = vector.broadcast %cst_32 : f32 to vector<32x1xf32>
    %48 = arith.divf %46, %47 : vector<32x1xf32>
    %49 = vector.broadcast %41 : vector<32x1xf32> to vector<32x512xf32>
    %50 = arith.subf %37, %49 : vector<32x512xf32>
    %cst_33 = arith.constant 9.99999974E-6 : f32
    %51 = vector.broadcast %cst_33 : f32 to vector<32x1xf32>
    %52 = arith.addf %48, %51 : vector<32x1xf32>
    %53 = math.rsqrt %52 : vector<32x1xf32>
    %54 = vector.broadcast %53 : vector<32x1xf32> to vector<32x512xf32>
    %55 = arith.mulf %50, %54 : vector<32x512xf32>
    %56 = vector.broadcast %2 : vector<1x512xf32> to vector<32x512xf32>
    %57 = arith.mulf %55, %56 : vector<32x512xf32>
    %58 = vector.broadcast %3 : vector<1x512xf32> to vector<32x512xf32>
    %59 = arith.addf %57, %58 : vector<32x512xf32>
    %cst_34 = arith.constant 0.000000e+00 : f32
    %60 = vector.broadcast %cst_34 : f32 to vector<32x512xf32>
    %61 = arith.maximumf %59, %60 : vector<32x512xf32>
    %62 = arith.truncf %61 : vector<32x512xf32> to vector<32x512xbf16>
    %c0_35 = arith.constant 0 : index
    %c0_36 = arith.constant 0 : index
    %63 = vector.load %arg6[%c0_35, %c0_36] : memref<512x128xbf16, #tpu.memory_space<vmem>>, vector<512x128xbf16>
    %cst_37 = arith.constant dense<0.000000e+00> : vector<32x128xf32>
    %64 = tpu.matmul %62, %63, %cst_37 {dimension_numbers = #tpu.dot_dimension_numbers<[1], [0], [0], [1], [0, 0, 1, 1], [], []>} : vector<32x512xbf16>, vector<512x128xbf16>, vector<32x128xf32> -> vector<32x128xf32>
    %65 = arith.mulf %64, %64 : vector<32x128xf32>
    %cst_38 = arith.constant dense<0.000000e+00> : vector<32xf32>
    %66 = vector.multi_reduction <add>, %65, %cst_38 [1] : vector<32x128xf32> to vector<32xf32>
    %67 = vector.shape_cast %66 : vector<32xf32> to vector<32x1xf32>
    %cst_39 = arith.constant 1.000000e-24 : f32
    %68 = vector.broadcast %cst_39 : f32 to vector<32x1xf32>
    %69 = arith.maximumf %67, %68 : vector<32x1xf32>
    %70 = math.rsqrt %69 : vector<32x1xf32>
    %71 = vector.broadcast %70 : vector<32x1xf32> to vector<32x128xf32>
    %72 = arith.mulf %64, %71 : vector<32x128xf32>
    %73 = vector.shape_cast %72 : vector<32x128xf32> to vector<2x16x128xf32>
    %c0_40 = arith.constant 0 : index
    %c0_41 = arith.constant 0 : index
    %c0_42 = arith.constant 0 : index
    %74 = vector.load %arg11[%c0_40, %c0_41, %c0_42] : memref<2x16x128xf32, #tpu.memory_space<vmem>>, vector<2x16x128xf32>
    tpu.vector_store %arg11[%c0_40, %c0_41, %c0_42], %73 {strides = array<i32>} : memref<2x16x128xf32, #tpu.memory_space<vmem>>, vector<2x16x128xf32>,
    return
  }
  func.func @transform_0(%arg0: i32) -> (i32, i32) {
    %c0_i32 = arith.constant 0 : i32
    %c0_i32_0 = arith.constant 0 : i32
    return %arg0, %c0_i32 : i32, i32
  }
  func.func @transform_1(%arg0: i32) -> (i32, i32) {
    %c0_i32 = arith.constant 0 : i32
    %c0_i32_0 = arith.constant 0 : i32
    %c0_i32_1 = arith.constant 0 : i32
    return %c0_i32, %c0_i32_0 : i32, i32
  }
  func.func @transform_2(%arg0: i32) -> (i32, i32) {
    %c0_i32 = arith.constant 0 : i32
    %c0_i32_0 = arith.constant 0 : i32
    %c0_i32_1 = arith.constant 0 : i32
    return %c0_i32, %c0_i32_0 : i32, i32
  }
  func.func @transform_3(%arg0: i32) -> (i32, i32) {
    %c0_i32 = arith.constant 0 : i32
    %c0_i32_0 = arith.constant 0 : i32
    %c0_i32_1 = arith.constant 0 : i32
    return %c0_i32, %c0_i32_0 : i32, i32
  }
  func.func @transform_4(%arg0: i32) -> (i32, i32) {
    %c0_i32 = arith.constant 0 : i32
    %c0_i32_0 = arith.constant 0 : i32
    %c0_i32_1 = arith.constant 0 : i32
    return %c0_i32, %c0_i32_0 : i32, i32
  }
  func.func @transform_5(%arg0: i32) -> (i32, i32) {
    %c0_i32 = arith.constant 0 : i32
    %c0_i32_0 = arith.constant 0 : i32
    %c0_i32_1 = arith.constant 0 : i32
    return %c0_i32, %c0_i32_0 : i32, i32
  }
  func.func @transform_6(%arg0: i32) -> (i32, i32) {
    %c0_i32 = arith.constant 0 : i32
    %c0_i32_0 = arith.constant 0 : i32
    %c0_i32_1 = arith.constant 0 : i32
    return %c0_i32, %c0_i32_0 : i32, i32
  }
  func.func @transform_7(%arg0: i32) -> (i32, i32, i32) {
    %c0_i32 = arith.constant 0 : i32
    %c0_i32_0 = arith.constant 0 : i32
    %c0_i32_1 = arith.constant 0 : i32
    return %arg0, %c0_i32, %c0_i32_0 : i32, i32, i32
  }
  func.func @transform_8(%arg0: i32) -> (i32, i32, i32) {
    %c0_i32 = arith.constant 0 : i32
    %c0_i32_0 = arith.constant 0 : i32
    %c0_i32_1 = arith.constant 0 : i32
    return %arg0, %c0_i32, %c0_i32_0 : i32, i32, i32
  }
  func.func @transform_9(%arg0: i32) -> (i32, i32, i32) {
    %c0_i32 = arith.constant 0 : i32
    %c0_i32_0 = arith.constant 0 : i32
    %c0_i32_1 = arith.constant 0 : i32
    return %arg0, %c0_i32, %c0_i32_0 : i32, i32, i32
  }
  func.func @transform_10(%arg0: i32) -> (i32, i32, i32) {
    %c0_i32 = arith.constant 0 : i32
    %c0_i32_0 = arith.constant 0 : i32
    %c0_i32_1 = arith.constant 0 : i32
    return %arg0, %c0_i32, %c0_i32_0 : i32, i32, i32
  }
}

</mosaic_0001>

<llo_original>
// kernel: model_forward.1
$region0: #{model_forward.1}
  #allocation0 [shape = 'u32[]', space=smem, size = 0x4, offset = 0x4, fixed_abs, tag = 'smem constant byte address 0x4 - core index']
  #allocation1 [shape = 'u32[144,128]{1,0:T(1,128)}', space=vmem, size = 0x12000, scoped, tag = 'internal scratch']
  %s0 = inlined_call_operand.vmem [shape: bf16[64,192], index: 0, kind: input, shape index: {}]
  %s1 = inlined_call_operand.vmem [shape: bf16[192,128], index: 1, kind: input, shape index: {}]
  %s2 = inlined_call_operand.vmem [shape: bf16[16,128], index: 2, kind: input, shape index: {}]
  %s3 = inlined_call_operand.vmem [shape: bf16[128,128], index: 3, kind: input, shape index: {}]
  %s4 = inlined_call_operand.vmem [shape: bf16[128,512], index: 4, kind: input, shape index: {}]
  %s5 = inlined_call_operand.vmem [shape: bf16[512,128], index: 5, kind: input, shape index: {}]
  %s6 = inlined_call_operand.vmem [shape: f32[1,1280], index: 6, kind: input, shape index: {}]
  %s7 = inlined_call_operand.vmem [shape: f32[4,16,128], index: 7, kind: output, shape index: {0}]
  %s8 = inlined_call_operand.vmem [shape: f32[4,16,16], index: 8, kind: output, shape index: {1}]
  %s9 = inlined_call_operand.vmem [shape: f32[4,16,128], index: 9, kind: output, shape index: {2}]
  %s10 = inlined_call_operand.vmem [shape: f32[4,16,128], index: 10, kind: output, shape index: {3}]
  %11 = xla_tuple %s7, %s8, %s9, %s10
  %s12 = sld [smem:[#allocation0]]
  $region85: #{model_forward.1} parent=0
    _
  %s14 = ssub.s32 1, %s12
  %s15 = scalar_select 0, %s14, %s12
  loop: start=0, step=1, limit=4
  $region2: #{model_forward.1} parent=0 // loop_pre_header
    _
  $region3: #{model_forward.1} parent=0 // loop_header
    %s17 = sphi 0, %s21
    %p18 = scmp.ge.s32.totalorder %s17, 4
    %s27 = sphi 0, %s29
    %s30 = sphi 0, %s27
    %s31 = sphi 0, %s30
    %s47 = sphi 0, %s31
    %s51 = sphi 0, %s51
    %s53 = sphi 0, %s51
    %s54 = sphi 0, %s53
    %s68 = sphi 0, %s54
    %s72 = sphi 0, %s72
    %s74 = sphi 0, %s72
    %s75 = sphi 0, %s74
    %s89 = sphi 0, %s75
    %s93 = sphi 0, %s93
    %s95 = sphi 0, %s93
    %s96 = sphi 0, %s95
    %s110 = sphi 0, %s96
    %s114 = sphi 0, %s114
    %s116 = sphi 0, %s114
    %s117 = sphi 0, %s116
    %s131 = sphi 0, %s117
    %s135 = sphi 0, %s135
    %s137 = sphi 0, %s135
    %s138 = sphi 0, %s137
    %s152 = sphi 0, %s138
    %s156 = sphi 0, %s156
    %s158 = sphi 0, %s156
    %s159 = sphi 0, %s158
    %s173 = sphi 0, %s159
    %s179 = sphi 0, %s181
    %s182 = sphi 0, %s179
    %s183 = sphi 0, %s182
    %s199 = sphi 0, %s183
    %s205 = sphi 0, %s207
    %s208 = sphi 0, %s205
    %s209 = sphi 0, %s208
    %s225 = sphi 0, %s209
    %s231 = sphi 0, %s233
    %s234 = sphi 0, %s231
    %s235 = sphi 0, %s234
    %s251 = sphi 0, %s235
    %s257 = sphi 0, %s259
    %s260 = sphi 0, %s257
    %s261 = sphi 0, %s260
    %s277 = sphi 0, %s261
  $region4: #{model_forward.1} parent=0 // loop_header_branch
    %20 = sbr.rel (%p18) target = $region8
  $region5: #{model_forward.1} parent=0 // loop_body
    %s22 = ssub.s32 %s17, 1
    %s23 = ssub.s32 %s17, 2
    %s24 = sadd.s32 %s17, 1
    %s25 = ssub.s32 %s17, %s24
    %p26 = scmp.eq.s32.totalorder %s25, 0
    %s28 = sadd.s32 %s27, 1
    %s29 = scalar_select %p26, %s27, %s28
    %p32 = pneg %p26
    %p33 = scmp.eq.s32.totalorder %s17, 1
    %p34 = por %p32, %p33
    %p35 = scmp.ne.s32.totalorder %s27, %s30
    %p36 = scmp.eq.s32.totalorder %s17, 0
    %p37 = por %p35, %p36
    %p38 = scmp.ne.s32.totalorder %s27, %s30
    %p39 = scmp.eq.s32.totalorder %s22, 1
    %p40 = por %p38, %p39
    %p41 = scmp.ne.s32.totalorder %s30, %s31
    %p42 = scmp.eq.s32.totalorder %s22, 0
    %p43 = por %p41, %p42
    %p44 = scmp.ne.s32.totalorder %s30, %s31
    %p45 = scmp.eq.s32.totalorder %s23, 1
    %p46 = por %p44, %p45
    %p48 = scmp.ne.s32.totalorder %s31, %s47
    %p49 = scmp.eq.s32.totalorder %s23, 0
    %p50 = por %p48, %p49
    %s52 = sadd.s32 %s51, 1
    %p55 = scmp.eq.s32.totalorder %s17, 1
    %p56 = scmp.ne.s32.totalorder %s51, %s53
    %p57 = scmp.eq.s32.totalorder %s17, 0
    %p58 = por %p56, %p57
    %p59 = scmp.ne.s32.totalorder %s51, %s53
    %p60 = scmp.eq.s32.totalorder %s22, 1
    %p61 = por %p59, %p60
    %p62 = scmp.ne.s32.totalorder %s53, %s54
    %p63 = scmp.eq.s32.totalorder %s22, 0
    %p64 = por %p62, %p63
    %p65 = scmp.ne.s32.totalorder %s53, %s54
    %p66 = scmp.eq.s32.totalorder %s23, 1
    %p67 = por %p65, %p66
    %p69 = scmp.ne.s32.totalorder %s54, %s68
    %p70 = scmp.eq.s32.totalorder %s23, 0
    %p71 = por %p69, %p70
    %s73 = sadd.s32 %s72, 1
    %p76 = scmp.eq.s32.totalorder %s17, 1
    %p77 = scmp.ne.s32.totalorder %s72, %s74
    %p78 = scmp.eq.s32.totalorder %s17, 0
    %p79 = por %p77, %p78
    %p80 = scmp.ne.s32.totalorder %s72, %s74
    %p81 = scmp.eq.s32.totalorder %s22, 1
    %p82 = por %p80, %p81
    %p83 = scmp.ne.s32.totalorder %s74, %s75
    %p84 = scmp.eq.s32.totalorder %s22, 0
    %p85 = por %p83, %p84
    %p86 = scmp.ne.s32.totalorder %s74, %s75
    %p87 = scmp.eq.s32.totalorder %s23, 1
    %p88 = por %p86, %p87
    %p90 = scmp.ne.s32.totalorder %s75, %s89
    %p91 = scmp.eq.s32.totalorder %s23, 0
    %p92 = por %p90, %p91
    %s94 = sadd.s32 %s93, 1
    %p97 = scmp.eq.s32.totalorder %s17, 1
    %p98 = scmp.ne.s32.totalorder %s93, %s95
    %p99 = scmp.eq.s32.totalorder %s17, 0
    %p100 = por %p98, %p99
    %p101 = scmp.ne.s32.totalorder %s93, %s95
    %p102 = scmp.eq.s32.totalorder %s22, 1
    %p103 = por %p101, %p102
    %p104 = scmp.ne.s32.totalorder %s95, %s96
    %p105 = scmp.eq.s32.totalorder %s22, 0
    %p106 = por %p104, %p105
    %p107 = scmp.ne.s32.totalorder %s95, %s96
    %p108 = scmp.eq.s32.totalorder %s23, 1
    %p109 = por %p107, %p108
    %p111 = scmp.ne.s32.totalorder %s96, %s110
    %p112 = scmp.eq.s32.totalorder %s23, 0
    %p113 = por %p111, %p112
    %s115 = sadd.s32 %s114, 1
    %p118 = scmp.eq.s32.totalorder %s17, 1
    %p119 = scmp.ne.s32.totalorder %s114, %s116
    %p120 = scmp.eq.s32.totalorder %s17, 0
    %p121 = por %p119, %p120
    %p122 = scmp.ne.s32.totalorder %s114, %s116
    %p123 = scmp.eq.s32.totalorder %s22, 1
    %p124 = por %p122, %p123
    %p125 = scmp.ne.s32.totalorder %s116, %s117
    %p126 = scmp.eq.s32.totalorder %s22, 0
    %p127 = por %p125, %p126
    %p128 = scmp.ne.s32.totalorder %s116, %s117
    %p129 = scmp.eq.s32.totalorder %s23, 1
    %p130 = por %p128, %p129
    %p132 = scmp.ne.s32.totalorder %s117, %s131
    %p133 = scmp.eq.s32.totalorder %s23, 0
    %p134 = por %p132, %p133
    %s136 = sadd.s32 %s135, 1
    %p139 = scmp.eq.s32.totalorder %s17, 1
    %p140 = scmp.ne.s32.totalorder %s135, %s137
    %p141 = scmp.eq.s32.totalorder %s17, 0
    %p142 = por %p140, %p141
    %p143 = scmp.ne.s32.totalorder %s135, %s137
    %p144 = scmp.eq.s32.totalorder %s22, 1
    %p145 = por %p143, %p144
    %p146 = scmp.ne.s32.totalorder %s137, %s138
    %p147 = scmp.eq.s32.totalorder %s22, 0
    %p148 = por %p146, %p147
    %p149 = scmp.ne.s32.totalorder %s137, %s138
    %p150 = scmp.eq.s32.totalorder %s23, 1
    %p151 = por %p149, %p150
    %p153 = scmp.ne.s32.totalorder %s138, %s152
    %p154 = scmp.eq.s32.totalorder %s23, 0
    %p155 = por %p153, %p154
    %s157 = sadd.s32 %s156, 1
    %p160 = scmp.eq.s32.totalorder %s17, 1
    %p161 = scmp.ne.s32.totalorder %s156, %s158
    %p162 = scmp.eq.s32.totalorder %s17, 0
    %p163 = por %p161, %p162
    %p164 = scmp.ne.s32.totalorder %s156, %s158
    %p165 = scmp.eq.s32.totalorder %s22, 1
    %p166 = por %p164, %p165
    %p167 = scmp.ne.s32.totalorder %s158, %s159
    %p168 = scmp.eq.s32.totalorder %s22, 0
    %p169 = por %p167, %p168
    %p170 = scmp.ne.s32.totalorder %s158, %s159
    %p171 = scmp.eq.s32.totalorder %s23, 1
    %p172 = por %p170, %p171
    %p174 = scmp.ne.s32.totalorder %s159, %s173
    %p175 = scmp.eq.s32.totalorder %s23, 0
    %p176 = por %p174, %p175
    %s177 = ssub.s32 %s17, %s24
    %p178 = scmp.eq.s32.totalorder %s177, 0
    %s180 = sadd.s32 %s179, 1
    %s181 = scalar_select %p178, %s179, %s180
    %p184 = pneg %p178
    %p185 = scmp.eq.s32.totalorder %s17, 1
    %p186 = por %p184, %p185
    %p187 = scmp.ne.s32.totalorder %s179, %s182
    %p188 = scmp.eq.s32.totalorder %s17, 0
    %p189 = por %p187, %p188
    %p190 = scmp.ne.s32.totalorder %s179, %s182
    %p191 = scmp.eq.s32.totalorder %s22, 1
    %p192 = por %p190, %p191
    %p193 = scmp.ne.s32.totalorder %s182, %s183
    %p194 = scmp.eq.s32.totalorder %s22, 0
    %p195 = por %p193, %p194
    %p196 = scmp.ne.s32.totalorder %s182, %s183
    %p197 = scmp.eq.s32.totalorder %s23, 1
    %p198 = por %p196, %p197
    %p200 = scmp.ne.s32.totalorder %s183, %s199
    %p201 = scmp.eq.s32.totalorder %s23, 0
    %p202 = por %p200, %p201
    %s203 = ssub.s32 %s17, %s24
    %p204 = scmp.eq.s32.totalorder %s203, 0
    %s206 = sadd.s32 %s205, 1
    %s207 = scalar_select %p204, %s205, %s206
    %p210 = pneg %p204
    %p211 = scmp.eq.s32.totalorder %s17, 1
    %p212 = por %p210, %p211
    %p213 = scmp.ne.s32.totalorder %s205, %s208
    %p214 = scmp.eq.s32.totalorder %s17, 0
    %p215 = por %p213, %p214
    %p216 = scmp.ne.s32.totalorder %s205, %s208
    %p217 = scmp.eq.s32.totalorder %s22, 1
    %p218 = por %p216, %p217
    %p219 = scmp.ne.s32.totalorder %s208, %s209
    %p220 = scmp.eq.s32.totalorder %s22, 0
    %p221 = por %p219, %p220
    %p222 = scmp.ne.s32.totalorder %s208, %s209
    %p223 = scmp.eq.s32.totalorder %s23, 1
    %p224 = por %p222, %p223
    %p226 = scmp.ne.s32.totalorder %s209, %s225
    %p227 = scmp.eq.s32.totalorder %s23, 0
    %p228 = por %p226, %p227
    %s229 = ssub.s32 %s17, %s24
    %p230 = scmp.eq.s32.totalorder %s229, 0
    %s232 = sadd.s32 %s231, 1
    %s233 = scalar_select %p230, %s231, %s232
    %p236 = pneg %p230
    %p237 = scmp.eq.s32.totalorder %s17, 1
    %p238 = por %p236, %p237
    %p239 = scmp.ne.s32.totalorder %s231, %s234
    %p240 = scmp.eq.s32.totalorder %s17, 0
    %p241 = por %p239, %p240
    %p242 = scmp.ne.s32.totalorder %s231, %s234
    %p243 = scmp.eq.s32.totalorder %s22, 1
    %p244 = por %p242, %p243
    %p245 = scmp.ne.s32.totalorder %s234, %s235
    %p246 = scmp.eq.s32.totalorder %s22, 0
    %p247 = por %p245, %p246
    %p248 = scmp.ne.s32.totalorder %s234, %s235
    %p249 = scmp.eq.s32.totalorder %s23, 1
    %p250 = por %p248, %p249
    %p252 = scmp.ne.s32.totalorder %s235, %s251
    %p253 = scmp.eq.s32.totalorder %s23, 0
    %p254 = por %p252, %p253
    %s255 = ssub.s32 %s17, %s24
    %p256 = scmp.eq.s32.totalorder %s255, 0
    %s258 = sadd.s32 %s257, 1
    %s259 = scalar_select %p256, %s257, %s258
    %p262 = pneg %p256
    %p263 = scmp.eq.s32.totalorder %s17, 1
    %p264 = por %p262, %p263
    %p265 = scmp.ne.s32.totalorder %s257, %s260
    %p266 = scmp.eq.s32.totalorder %s17, 0
    %p267 = por %p265, %p266
    %p268 = scmp.ne.s32.totalorder %s257, %s260
    %p269 = scmp.eq.s32.totalorder %s22, 1
    %p270 = por %p268, %p269
    %p271 = scmp.ne.s32.totalorder %s260, %s261
    %p272 = scmp.eq.s32.totalorder %s22, 0
    %p273 = por %p271, %p272
    %p274 = scmp.ne.s32.totalorder %s260, %s261
    %p275 = scmp.eq.s32.totalorder %s23, 1
    %p276 = por %p274, %p275
    %p278 = scmp.ne.s32.totalorder %s261, %s277
    %p279 = scmp.eq.s32.totalorder %s23, 0
    %p280 = por %p278, %p279
    %p281 = scmp.le.s32.totalorder 1, %s17
    %p282 = scmp.lt.s32.totalorder %s17, 3
    %p283 = pnand %p281, %p282
    %p284 = pneg %p283
    // Predicated region
    $region9: #{model_forward.1} parent=5 // pred_check
      _
    $region10: #{model_forward.1} parent=5 // pred_check_branch
      %286 = sbr.rel (%p283) target = $region12
    $region11: #{model_forward.1} parent=5 // pred_region
      %s287 = ssub.s32 %s17, 1
      // Predicated region
      $region13: #{model_forward.1} parent=11 // pred_check
        %p288 = pneg %p64
      $region14: #{model_forward.1} parent=11 // pred_check_branch
        %290 = sbr.rel (%p288) target = $region16
      $region15: #{model_forward.1} parent=11 // pred_region
        _
      $region16: #{model_forward.1} parent=11 // pred_fallthru
        _
      // Predicated region
      $region17: #{model_forward.1} parent=11 // pred_check
        %p291 = pneg %p85
      $region18: #{model_forward.1} parent=11 // pred_check_branch
        %293 = sbr.rel (%p291) target = $region20
      $region19: #{model_forward.1} parent=11 // pred_region
        _
      $region20: #{model_forward.1} parent=11 // pred_fallthru
        _
      // Predicated region
      $region21: #{model_forward.1} parent=11 // pred_check
        %p294 = pneg %p106
      $region22: #{model_forward.1} parent=11 // pred_check_branch
        %296 = sbr.rel (%p294) target = $region24
      $region23: #{model_forward.1} parent=11 // pred_region
        _
      $region24: #{model_forward.1} parent=11 // pred_fallthru
        _
      // Predicated region
      $region25: #{model_forward.1} parent=11 // pred_check
        %p297 = pneg %p127
      $region26: #{model_forward.1} parent=11 // pred_check_branch
        %299 = sbr.rel (%p297) target = $region28
      $region27: #{model_forward.1} parent=11 // pred_region
        _
      $region28: #{model_forward.1} parent=11 // pred_fallthru
        _
      // Predicated region
      $region29: #{model_forward.1} parent=11 // pred_check
        %p300 = pneg %p148
      $region30: #{model_forward.1} parent=11 // pred_check_branch
        %302 = sbr.rel (%p300) target = $region32
      $region31: #{model_forward.1} parent=11 // pred_region
        _
      $region32: #{model_forward.1} parent=11 // pred_fallthru
        _
      // Predicated region
      $region33: #{model_forward.1} parent=11 // pred_check
        %p303 = pneg %p169
      $region34: #{model_forward.1} parent=11 // pred_check_branch
        %305 = sbr.rel (%p303) target = $region36
      $region35: #{model_forward.1} parent=11 // pred_region
        _
      $region36: #{model_forward.1} parent=11 // pred_fallthru
        _
    $region12: #{model_forward.1} parent=5 // pred_fallthru
      _
    %p306 = scmp.lt.s32.totalorder %s17, 2
    // Predicated region
    $region37: #{model_forward.1} parent=5 // pred_check
      %p307 = pneg %p306
    $region38: #{model_forward.1} parent=5 // pred_check_branch
      %309 = sbr.rel (%p307) target = $region40
    $region39: #{model_forward.1} parent=5 // pred_region
      // Predicated region
      $region41: #{model_forward.1} parent=39 // pred_check
        %p310 = pneg %p37
      $region42: #{model_forward.1} parent=39 // pred_check_branch
        %312 = sbr.rel (%p310) target = $region44
      $region43: #{model_forward.1} parent=39 // pred_region
        %s313 = smul.u32 4, %s17
        %p314 = scmp.lt.s32.totalorder %s313, 7
        %s315 = scalar_select %p314, %s313, 7
        %s316 = smul.addr %s315, 2
        %s317 = smul.addr %s316, 4
        %s318 = scalar_lea.vmem %s0, %s317
        %s319 = smul.u32 4, %s17
      $region44: #{model_forward.1} parent=39 // pred_fallthru
        _
    $region40: #{model_forward.1} parent=5 // pred_fallthru
      _
    %p320 = scmp.le.s32.totalorder 1, %s17
    %p321 = scmp.lt.s32.totalorder %s17, 3
    %p322 = pnand %p320, %p321
    %p323 = pneg %p322
    // Predicated region
    $region45: #{model_forward.1} parent=5 // pred_check
      _
    $region46: #{model_forward.1} parent=5 // pred_check_branch
      %325 = sbr.rel (%p322) target = $region48
    $region47: #{model_forward.1} parent=5 // pred_region
      %s326 = ssub.s32 %s17, 1
      %s327 = smul.u32 4, %s22
      %p328 = scmp.lt.s32.totalorder %s327, 7
      %s329 = scalar_select %p328, %s327, 7
      %s330 = smul.addr %s329, 2
      %s331 = smul.addr %s330, 4
      %s332 = scalar_lea.vmem %s0, %s331
      %p333 = pneg %p43
      %p334 = pneg %p40
      %p335 = pneg %p64
      %p336 = pneg %p61
      %p337 = pneg %p85
      %p338 = pneg %p82
      %p339 = pneg %p106
      %p340 = pneg %p103
      %p341 = pneg %p127
      %p342 = pneg %p124
      %p343 = pneg %p148
      %p344 = pneg %p145
      %p345 = pneg %p169
      %p346 = pneg %p166
      %p347 = pneg %p195
      %p348 = pneg %p192
      %s349 = smul.u32 2, %s22
      %p350 = scmp.lt.s32.totalorder %s349, 3
      %s351 = scalar_select %p350, %s349, 3
      %s352 = smul.addr %s351, 2
      %s353 = smul.addr %s352, 8
      %s354 = scalar_lea.vmem %s7, %s353
      %p355 = pneg %p221
      %p356 = pneg %p218
      %s357 = smul.u32 2, %s22
      %p358 = scmp.lt.s32.totalorder %s357, 3
      %s359 = scalar_select %p358, %s357, 3
      %s360 = smul.addr %s359, 2
      %s361 = smul.addr %s360, 8
      %s362 = scalar_lea.vmem %s8, %s361
      %p363 = pneg %p247
      %p364 = pneg %p244
      %s365 = smul.u32 2, %s22
      %p366 = scmp.lt.s32.totalorder %s365, 3
      %s367 = scalar_select %p366, %s365, 3
      %s368 = smul.addr %s367, 2
      %s369 = smul.addr %s368, 8
      %s370 = scalar_lea.vmem %s9, %s369
      %p371 = pneg %p273
      %p372 = pneg %p270
      %s373 = smul.u32 2, %s22
      %p374 = scmp.lt.s32.totalorder %s373, 3
      %s375 = scalar_select %p374, %s373, 3
      %s376 = smul.addr %s375, 2
      %s377 = smul.addr %s376, 8
      %s378 = scalar_lea.vmem %s10, %s377
      %s379 = smul.u32 4, %s22
      %p380 = scmp.lt.s32.totalorder %s379, 7
      %s381 = scalar_select %p380, %s379, 7
      %s382 = smul.addr %s381, 2
      %s383 = smul.addr %s382, 4
      %s384 = scalar_lea.vmem %s0, %s383
      %s385 = smul.u32 4, %s22
      %s386 = smul.u32 2, %s22
      %p387 = scmp.lt.s32.totalorder %s386, 3
      %s388 = scalar_select %p387, %s386, 3
      %s389 = smul.addr %s388, 2
      %s390 = smul.addr %s389, 8
      %s391 = scalar_lea.vmem %s7, %s390
      %s392 = smul.u32 2, %s22
      %s393 = smul.u32 2, %s22
      %p394 = scmp.lt.s32.totalorder %s393, 3
      %s395 = scalar_select %p394, %s393, 3
      %s396 = smul.addr %s395, 2
      %s397 = smul.addr %s396, 8
      %s398 = scalar_lea.vmem %s8, %s397
      %s399 = smul.u32 2, %s22
      %s400 = smul.u32 2, %s22
      %p401 = scmp.lt.s32.totalorder %s400, 3
      %s402 = scalar_select %p401, %s400, 3
      %s403 = smul.addr %s402, 2
      %s404 = smul.addr %s403, 8
      %s405 = scalar_lea.vmem %s9, %s404
      %s406 = smul.u32 2, %s22
      %s407 = smul.u32 2, %s22
      %p408 = scmp.lt.s32.totalorder %s407, 3
      %s409 = scalar_select %p408, %s407, 3
      %s410 = smul.addr %s409, 2
      %s411 = smul.addr %s410, 8
      %s412 = scalar_lea.vmem %s10, %s411
      %s413 = smul.u32 2, %s22
      %v415 = vld [vmem:[%s6] sm:$0x1]
      %v416 = vld [vmem:[%s6 + $0x1] sm:$0x1]
      %v417 = vld [vmem:[%s6 + $0x2] sm:$0xf]
      %v418 = vld [vmem:[%s6 + $0x6] sm:$0xf]
      %v419 = vld [vmem:[%s384] sm:$0xff]
      %v420 = vld [vmem:[%s384 + $0x8] sm:$0xff]
      %v421 = vld [vmem:[%s384 + $0x10] sm:$0xff]
      %v422 = vld [vmem:[%s384 + $0x18] sm:$0xff]
      %v423 = vld [vmem:[%s1] sm:$0xf]
      %v424 = vld [vmem:[%s1 + $0x4] sm:$0xf]
      %v425 = vld [vmem:[%s1 + $0x8] sm:$0xf]
      %v426 = vld [vmem:[%s1 + $0xc] sm:$0xf]
      %v427 = vld [vmem:[%s1 + $0x10] sm:$0xf]
      %v428 = vld [vmem:[%s1 + $0x14] sm:$0xf]
      %v429 = vld [vmem:[%s1 + $0x18] sm:$0xf]
      %v430 = vld [vmem:[%s1 + $0x1c] sm:$0xf]
      %v431 = vld [vmem:[%s1 + $0x20] sm:$0xf]
      %v432 = vld [vmem:[%s1 + $0x24] sm:$0xf]
      %v433 = vld [vmem:[%s1 + $0x28] sm:$0xf]
      %v434 = vld [vmem:[%s1 + $0x2c] sm:$0xf]
      %v435 = vld [vmem:[%s1 + $0x30] sm:$0xf]
      %v436 = vld [vmem:[%s1 + $0x34] sm:$0xf]
      %v437 = vld [vmem:[%s1 + $0x38] sm:$0xf]
      %v438 = vld [vmem:[%s1 + $0x3c] sm:$0xf]
      %v439 = vld [vmem:[%s1 + $0x40] sm:$0xf]
      %v440 = vld [vmem:[%s1 + $0x44] sm:$0xf]
      %v441 = vld [vmem:[%s1 + $0x48] sm:$0xf]
      %v442 = vld [vmem:[%s1 + $0x4c] sm:$0xf]
      %v443 = vld [vmem:[%s1 + $0x50] sm:$0xf]
      %v444 = vld [vmem:[%s1 + $0x54] sm:$0xf]
      %v445 = vld [vmem:[%s1 + $0x58] sm:$0xf]
      %v446 = vld [vmem:[%s1 + $0x5c] sm:$0xf]
      %v448 = vlaneseq
      %v449 = vshrl.u32 %v448, 7
      %v450 = vsub.s32 0, %v449
      %v451 = vrot.slane %v415, %v450
      %v457 = vunpack.c.l.b16 %v419
      %v458 = vunpack.c.h.b16 %v419
      %v459 = vunpack.c.l.b16 %v420
      %v460 = vunpack.c.h.b16 %v420
      %v461 = vunpack.c.l.b16 %v421
      %v462 = vunpack.c.h.b16 %v421
      %v463 = vunpack.c.l.b16 %v422
      %v464 = vunpack.c.h.b16 %v422
      %v465 = vpack.c.b16 %v459, %v457
      %v466 = vpack.c.b16 %v460, %v458
      %v467 = vpack.c.b16 %v463, %v461
      %v468 = vpack.c.b16 %v464, %v462
      %v495 = vunpack.c.l.b16 %v423
      %v496 = vunpack.c.l.b16 %v424
      %v497 = vunpack.c.l.b16 %v425
      %v498 = vunpack.c.l.b16 %v426
      %v499 = vunpack.c.l.b16 %v427
      %v500 = vunpack.c.l.b16 %v428
      %v501 = vunpack.c.l.b16 %v429
      %v502 = vunpack.c.l.b16 %v430
      %v503 = vunpack.c.l.b16 %v431
      %v504 = vunpack.c.l.b16 %v432
      %v505 = vunpack.c.l.b16 %v433
      %v506 = vunpack.c.l.b16 %v434
      %v507 = vunpack.c.l.b16 %v435
      %v508 = vunpack.c.l.b16 %v436
      %v509 = vunpack.c.l.b16 %v437
      %v510 = vunpack.c.l.b16 %v438
      %v511 = vunpack.c.l.b16 %v439
      %v512 = vunpack.c.l.b16 %v440
      %v513 = vunpack.c.l.b16 %v441
      %v514 = vunpack.c.l.b16 %v442
      %v515 = vunpack.c.l.b16 %v443
      %v516 = vunpack.c.l.b16 %v444
      %v517 = vunpack.c.l.b16 %v445
      %v518 = vunpack.c.l.b16 %v446
      %v519 = vpack.c.b16 %v496, %v495
      %v520 = vpack.c.b16 %v498, %v497
      %v521 = vpack.c.b16 %v500, %v499
      %v522 = vpack.c.b16 %v502, %v501
      %v523 = vpack.c.b16 %v504, %v503
      %v524 = vpack.c.b16 %v506, %v505
      %v525 = vpack.c.b16 %v508, %v507
      %v526 = vpack.c.b16 %v510, %v509
      %v527 = vpack.c.b16 %v512, %v511
      %v528 = vpack.c.b16 %v514, %v513
      %v529 = vpack.c.b16 %v516, %v515
      %v530 = vpack.c.b16 %v518, %v517
      %vm543 = vcmask 523264
      %v545 = vsel %vm543, %v466, 0
      %v548 = vsel %vm543, %v468, 0
      %550 = vmatprep.subr.bf16.mxu0 0
      %551 = vmatpush1.bf16.msra.mxu0 %v526
      %552 = vmatprep.subr.bf16.mxu0 0
      %553 = vmatpush1.bf16.msra.mxu0 %v525
      %554 = vmatprep.subr.bf16.mxu0 0
      %555 = vmatpush1.bf16.msra.mxu0 %v524
      %556 = vmatprep.subr.bf16.mxu0 0
      %557 = vmatpush1.bf16.msra.mxu0 %v523
      %558 = vmatprep.subr.bf16.mxu0 0
      %559 = vmatpush1.bf16.msra.mxu0 %v522
      %560 = vmatprep.subr.bf16.mxu0 0
      %561 = vmatpush1.bf16.msra.mxu0 %v521
      %562 = vmatprep.subr.bf16.mxu0 0
      %563 = vmatpush1.bf16.msra.mxu0 %v520
      %564 = vmatprep.subr.bf16.mxu0 0
      %565 = vmatpush1.bf16.msra.mxu0 %v519
      %566 = vmatprep.subr.bf16.mxu0 0
      %567 = vmatpush2.bf16.msra.mxu0 0
      %568 = vmatprep.subr.bf16.mxu0 0
      %569 = vmatpush2.bf16.msra.mxu0 0
      %570 = vmatprep.subr.bf16.mxu0 0
      %571 = vmatpush2.bf16.msra.mxu0 0
      %572 = vmatprep.subr.bf16.mxu0 0
      %573 = vmatpush2.bf16.msra.mxu0 0
      %574 = vmatprep.subr.bf16.mxu0 0
      %575 = vmatpush2.bf16.msra.mxu0 %v530
      %576 = vmatprep.subr.bf16.mxu0 0
      %577 = vmatpush2.bf16.msra.mxu0 %v529
      %578 = vmatprep.subr.bf16.mxu0 0
      %579 = vmatpush2.bf16.msra.mxu0 %v528
      %580 = vmatprep.subr.bf16.mxu0 0
      %581 = vmatpush2.bf16.msra.mxu0 %v527
      %582 = vmatprep.mubr.bf16.mxu0 %v545
      %583 = vmatmul.mubr.bf16.gmra.mxu0 %v465
      %v584 = vpop.f32.mrf.mxu0
      %v585 = vadd.f32 %v451, %v584
      %v586 = vpop.f32.mrf.mxu0
      %v587 = vpop.f32.mrf.mxu0
      %v588 = vadd.f32 %v451, %v587
      %v589 = vpop.f32.mrf.mxu0
      %590 = vmatprep.mubr.bf16.mxu0 %v548
      %591 = vmatmul.mubr.bf16.gmra.mxu0 %v467
      %v592 = vpop.f32.mrf.mxu0
      %v593 = vadd.f32 %v451, %v592
      %v594 = vpop.f32.mrf.mxu0
      %v595 = vpop.f32.mrf.mxu0
      %v596 = vadd.f32 %v451, %v595
      %v597 = vpop.f32.mrf.mxu0
      %598 = vdwg.mxu0
      %v599 = vpack.c.bf16 %v588, %v585
      %v600 = vpack.c.bf16 %v596, %v593
      %v601 = vld [vmem:[%s2] sm:$0xf]
      %v602 = vld [vmem:[%s2 + $0x4] sm:$0xf]
      %v605 = vunpack.c.l.b16 %v601
      %v606 = vunpack.c.l.b16 %v602
      %v607 = vpack.c.b16 %v606, %v605
      %609 = vmatprep.subr.bf16.mxu0 0
      %610 = vmatpush1.bf16.xpose.msra.mxu0 0
      %611 = vmatprep.subr.bf16.mxu0 0
      %612 = vmatpush1.bf16.xpose.msra.mxu0 0
      %613 = vmatprep.subr.bf16.mxu0 0
      %614 = vmatpush1.bf16.xpose.msra.mxu0 0
      %615 = vmatprep.subr.bf16.mxu0 0
      %616 = vmatpush1.bf16.xpose.msra.mxu0 0
      %617 = vmatprep.subr.bf16.mxu0 0
      %618 = vmatpush1.bf16.xpose.msra.mxu0 0
      %619 = vmatprep.subr.bf16.mxu0 0
      %620 = vmatpush1.bf16.xpose.msra.mxu0 0
      %621 = vmatprep.subr.bf16.mxu0 0
      %622 = vmatpush1.bf16.xpose.msra.mxu0 0
      %623 = vmatprep.subr.bf16.mxu0 0
      %624 = vmatpush1.bf16.xpose.msra.mxu0 %v599
      %625 = vmatprep.subr.bf16.mxu0 0
      %626 = vmatpush2.bf16.xpose.msra.mxu0 0
      %627 = vmatprep.subr.bf16.mxu0 0
      %628 = vmatpush2.bf16.xpose.msra.mxu0 0
      %629 = vmatprep.subr.bf16.mxu0 0
      %630 = vmatpush2.bf16.xpose.msra.mxu0 0
      %631 = vmatprep.subr.bf16.mxu0 0
      %632 = vmatpush2.bf16.xpose.msra.mxu0 0
      %633 = vmatprep.subr.bf16.mxu0 0
      %634 = vmatpush2.bf16.xpose.msra.mxu0 0
      %635 = vmatprep.subr.bf16.mxu0 0
      %636 = vmatpush2.bf16.xpose.msra.mxu0 0
      %637 = vmatprep.subr.bf16.mxu0 0
      %638 = vmatpush2.bf16.xpose.msra.mxu0 0
      %639 = vmatprep.subr.bf16.mxu0 0
      %640 = vmatpush2.bf16.xpose.msra.mxu0 0
      %641 = vmatprep.mubr.bf16.mxu0 0
      %642 = vmatmul.mubr.bf16.gmra.mxu0 %v607
      %v643 = vpop.f32.mrf.mxu0
      %v644 = vadd.f32 0.0, %v643
      %v645 = vpop.f32.mrf.mxu0
      %v646 = vpop.f32.mrf.mxu0
      %v647 = vadd.f32 0.0, %v646
      %v648 = vpop.f32.mrf.mxu0
      %649 = vdwg.mxu0
      %650 = vmatprep.subr.bf16.mxu0 0
      %651 = vmatpush1.bf16.xpose.msra.mxu0 0
      %652 = vmatprep.subr.bf16.mxu0 0
      %653 = vmatpush1.bf16.xpose.msra.mxu0 0
      %654 = vmatprep.subr.bf16.mxu0 0
      %655 = vmatpush1.bf16.xpose.msra.mxu0 0
      %656 = vmatprep.subr.bf16.mxu0 0
      %657 = vmatpush1.bf16.xpose.msra.mxu0 0
      %658 = vmatprep.subr.bf16.mxu0 0
      %659 = vmatpush1.bf16.xpose.msra.mxu0 0
      %660 = vmatprep.subr.bf16.mxu0 0
      %661 = vmatpush1.bf16.xpose.msra.mxu0 0
      %662 = vmatprep.subr.bf16.mxu0 0
      %663 = vmatpush1.bf16.xpose.msra.mxu0 0
      %664 = vmatprep.subr.bf16.mxu0 0
      %665 = vmatpush1.bf16.xpose.msra.mxu0 %v600
      %666 = vmatprep.subr.bf16.mxu0 0
      %667 = vmatpush2.bf16.xpose.msra.mxu0 0
      %668 = vmatprep.subr.bf16.mxu0 0
      %669 = vmatpush2.bf16.xpose.msra.mxu0 0
      %670 = vmatprep.subr.bf16.mxu0 0
      %671 = vmatpush2.bf16.xpose.msra.mxu0 0
      %672 = vmatprep.subr.bf16.mxu0 0
      %673 = vmatpush2.bf16.xpose.msra.mxu0 0
      %674 = vmatprep.subr.bf16.mxu0 0
      %675 = vmatpush2.bf16.xpose.msra.mxu0 0
      %676 = vmatprep.subr.bf16.mxu0 0
      %677 = vmatpush2.bf16.xpose.msra.mxu0 0
      %678 = vmatprep.subr.bf16.mxu0 0
      %679 = vmatpush2.bf16.xpose.msra.mxu0 0
      %680 = vmatprep.subr.bf16.mxu0 0
      %681 = vmatpush2.bf16.xpose.msra.mxu0 0
      %682 = vmatprep.mubr.bf16.mxu0 0
      %683 = vmatmul.mubr.bf16.gmra.mxu0 %v607
      %v684 = vpop.f32.mrf.mxu0
      %v685 = vadd.f32 0.0, %v684
      %v686 = vpop.f32.mrf.mxu0
      %v687 = vpop.f32.mrf.mxu0
      %v688 = vadd.f32 0.0, %v687
      %v689 = vpop.f32.mrf.mxu0
      %690 = vdwg.mxu0
      %vm691 = vcmask 130048
      %v692 = vsel %vm691, %v644, -inf
      %693 = vmax.xlane.f32.xlu0 %v692
      %v694 = vpop.xlane.xlu0 %693
      %v695 = vsel %vm691, %v647, -inf
      %696 = vmax.xlane.f32.xlu0 %v695
      %v697 = vpop.xlane.xlu0 %696
      %v698 = vsel %vm691, %v685, -inf
      %699 = vmax.xlane.f32.xlu0 %v698
      %v700 = vpop.xlane.xlu0 %699
      %v701 = vsel %vm691, %v688, -inf
      %702 = vmax.xlane.f32.xlu0 %v701
      %v703 = vpop.xlane.xlu0 %702
      %v704 = vsub.f32 %v644, %v694
      %v705 = vsub.f32 %v647, %v697
      %v706 = vsub.f32 %v685, %v700
      %v707 = vsub.f32 %v688, %v703
      %v708 = vmul.f32 %v704, 1.442695
      %v709 = vpow.pop %v708
      %v710 = vmul.f32 %v705, 1.442695
      %v711 = vpow.pop %v710
      %v712 = vmul.f32 %v706, 1.442695
      %v713 = vpow.pop %v712
      %v714 = vmul.f32 %v707, 1.442695
      %v715 = vpow.pop %v714
      %v716 = vsel %vm691, %v709, 0.0
      %717 = vadd.xlane.f32.xlu0 %v716
      %v718 = vpop.xlane.xlu0 %717
      %v719 = vsel %vm691, %v711, 0.0
      %720 = vadd.xlane.f32.xlu0 %v719
      %v721 = vpop.xlane.xlu0 %720
      %v722 = vsel %vm691, %v713, 0.0
      %723 = vadd.xlane.f32.xlu0 %v722
      %v724 = vpop.xlane.xlu0 %723
      %v725 = vsel %vm691, %v715, 0.0
      %726 = vadd.xlane.f32.xlu0 %v725
      %v727 = vpop.xlane.xlu0 %726
      %v728 = vrcp.pop %v718
      %v729 = vmul.f32 %v709, %v728
      %v730 = vrcp.pop %v721
      %v731 = vmul.f32 %v711, %v730
      %v732 = vrcp.pop %v724
      %v733 = vmul.f32 %v713, %v732
      %v734 = vrcp.pop %v727
      %v735 = vmul.f32 %v715, %v734
      %736 = vst.msk [vmem:[%s398] sm:$0xff] %vm691, %v729
      %737 = vst.msk [vmem:[%s398 + $0x8] sm:$0xff] %vm691, %v731
      %738 = vst.msk [vmem:[%s398 + $0x10] sm:$0xff] %vm691, %v733
      %739 = vst.msk [vmem:[%s398 + $0x18] sm:$0xff] %vm691, %v735
      %v740 = vpack.c.bf16 %v731, %v729
      %v741 = vpack.c.bf16 %v735, %v733
      %v743 = vsel %vm691, %v740, 0
      %745 = vmatprep.subr.bf16.mxu0 0
      %746 = vmatpush1.bf16.msra.mxu0 0
      %747 = vmatprep.subr.bf16.mxu0 0
      %748 = vmatpush1.bf16.msra.mxu0 0
      %749 = vmatprep.subr.bf16.mxu0 0
      %750 = vmatpush1.bf16.msra.mxu0 0
      %751 = vmatprep.subr.bf16.mxu0 0
      %752 = vmatpush1.bf16.msra.mxu0 0
      %753 = vmatprep.subr.bf16.mxu0 0
      %754 = vmatpush1.bf16.msra.mxu0 0
      %755 = vmatprep.subr.bf16.mxu0 0
      %756 = vmatpush1.bf16.msra.mxu0 0
      %757 = vmatprep.subr.bf16.mxu0 0
      %758 = vmatpush1.bf16.msra.mxu0 0
      %759 = vmatprep.subr.bf16.mxu0 0
      %760 = vmatpush1.bf16.msra.mxu0 %v599
      %761 = vmatprep.subr.bf16.mxu0 0
      %762 = vmatpush2.bf16.msra.mxu0 0
      %763 = vmatprep.subr.bf16.mxu0 0
      %764 = vmatpush2.bf16.msra.mxu0 0
      %765 = vmatprep.subr.bf16.mxu0 0
      %766 = vmatpush2.bf16.msra.mxu0 0
      %767 = vmatprep.subr.bf16.mxu0 0
      %768 = vmatpush2.bf16.msra.mxu0 0
      %769 = vmatprep.subr.bf16.mxu0 0
      %770 = vmatpush2.bf16.msra.mxu0 0
      %771 = vmatprep.subr.bf16.mxu0 0
      %772 = vmatpush2.bf16.msra.mxu0 0
      %773 = vmatprep.subr.bf16.mxu0 0
      %774 = vmatpush2.bf16.msra.mxu0 0
      %775 = vmatprep.subr.bf16.mxu0 0
      %776 = vmatpush2.bf16.msra.mxu0 0
      %777 = vmatprep.mubr.bf16.mxu0 0
      %778 = vmatmul.mubr.bf16.gmra.mxu0 %v743
      %v779 = vpop.f32.mrf.mxu0
      %v780 = vadd.f32 0.0, %v779
      %v781 = vpop.f32.mrf.mxu0
      %v782 = vpop.f32.mrf.mxu0
      %v783 = vadd.f32 0.0, %v782
      %v784 = vpop.f32.mrf.mxu0
      %785 = vdwg.mxu0
      %v787 = vsel %vm691, %v741, 0
      %789 = vmatprep.subr.bf16.mxu0 0
      %790 = vmatpush1.bf16.msra.mxu0 0
      %791 = vmatprep.subr.bf16.mxu0 0
      %792 = vmatpush1.bf16.msra.mxu0 0
      %793 = vmatprep.subr.bf16.mxu0 0
      %794 = vmatpush1.bf16.msra.mxu0 0
      %795 = vmatprep.subr.bf16.mxu0 0
      %796 = vmatpush1.bf16.msra.mxu0 0
      %797 = vmatprep.subr.bf16.mxu0 0
      %798 = vmatpush1.bf16.msra.mxu0 0
      %799 = vmatprep.subr.bf16.mxu0 0
      %800 = vmatpush1.bf16.msra.mxu0 0
      %801 = vmatprep.subr.bf16.mxu0 0
      %802 = vmatpush1.bf16.msra.mxu0 0
      %803 = vmatprep.subr.bf16.mxu0 0
      %804 = vmatpush1.bf16.msra.mxu0 %v600
      %805 = vmatprep.subr.bf16.mxu0 0
      %806 = vmatpush2.bf16.msra.mxu0 0
      %807 = vmatprep.subr.bf16.mxu0 0
      %808 = vmatpush2.bf16.msra.mxu0 0
      %809 = vmatprep.subr.bf16.mxu0 0
      %810 = vmatpush2.bf16.msra.mxu0 0
      %811 = vmatprep.subr.bf16.mxu0 0
      %812 = vmatpush2.bf16.msra.mxu0 0
      %813 = vmatprep.subr.bf16.mxu0 0
      %814 = vmatpush2.bf16.msra.mxu0 0
      %815 = vmatprep.subr.bf16.mxu0 0
      %816 = vmatpush2.bf16.msra.mxu0 0
      %817 = vmatprep.subr.bf16.mxu0 0
      %818 = vmatpush2.bf16.msra.mxu0 0
      %819 = vmatprep.subr.bf16.mxu0 0
      %820 = vmatpush2.bf16.msra.mxu0 0
      %821 = vmatprep.mubr.bf16.mxu0 0
      %822 = vmatmul.mubr.bf16.gmra.mxu0 %v787
      %v823 = vpop.f32.mrf.mxu0
      %v824 = vadd.f32 0.0, %v823
      %v825 = vpop.f32.mrf.mxu0
      %v826 = vpop.f32.mrf.mxu0
      %v827 = vadd.f32 0.0, %v826
      %v828 = vpop.f32.mrf.mxu0
      %829 = vdwg.mxu0
      %830 = vst [vmem:[%s391] sm:$0xff] %v780
      %831 = vst [vmem:[%s391 + $0x8] sm:$0xff] %v783
      %832 = vst [vmem:[%s391 + $0x10] sm:$0xff] %v824
      %833 = vst [vmem:[%s391 + $0x18] sm:$0xff] %v827
      %v834 = vpack.c.bf16 %v783, %v780
      %v835 = vpack.c.bf16 %v827, %v824
      %v836 = vld [vmem:[%s3] sm:$0xf]
      %v837 = vld [vmem:[%s3 + $0x4] sm:$0xf]
      %v838 = vld [vmem:[%s3 + $0x8] sm:$0xf]
      %v839 = vld [vmem:[%s3 + $0xc] sm:$0xf]
      %v840 = vld [vmem:[%s3 + $0x10] sm:$0xf]
      %v841 = vld [vmem:[%s3 + $0x14] sm:$0xf]
      %v842 = vld [vmem:[%s3 + $0x18] sm:$0xf]
      %v843 = vld [vmem:[%s3 + $0x1c] sm:$0xf]
      %v844 = vld [vmem:[%s3 + $0x20] sm:$0xf]
      %v845 = vld [vmem:[%s3 + $0x24] sm:$0xf]
      %v846 = vld [vmem:[%s3 + $0x28] sm:$0xf]
      %v847 = vld [vmem:[%s3 + $0x2c] sm:$0xf]
      %v848 = vld [vmem:[%s3 + $0x30] sm:$0xf]
      %v849 = vld [vmem:[%s3 + $0x34] sm:$0xf]
      %v850 = vld [vmem:[%s3 + $0x38] sm:$0xf]
      %v851 = vld [vmem:[%s3 + $0x3c] sm:$0xf]
      %v853 = vlaneseq
      %v854 = vshrl.u32 %v853, 7
      %v855 = vsub.s32 0, %v854
      %v856 = vrot.slane %v416, %v855
      %v874 = vunpack.c.l.b16 %v836
      %v875 = vunpack.c.l.b16 %v837
      %v876 = vunpack.c.l.b16 %v838
      %v877 = vunpack.c.l.b16 %v839
      %v878 = vunpack.c.l.b16 %v840
      %v879 = vunpack.c.l.b16 %v841
      %v880 = vunpack.c.l.b16 %v842
      %v881 = vunpack.c.l.b16 %v843
      %v882 = vunpack.c.l.b16 %v844
      %v883 = vunpack.c.l.b16 %v845
      %v884 = vunpack.c.l.b16 %v846
      %v885 = vunpack.c.l.b16 %v847
      %v886 = vunpack.c.l.b16 %v848
      %v887 = vunpack.c.l.b16 %v849
      %v888 = vunpack.c.l.b16 %v850
      %v889 = vunpack.c.l.b16 %v851
      %v890 = vpack.c.b16 %v875, %v874
      %v891 = vpack.c.b16 %v877, %v876
      %v892 = vpack.c.b16 %v879, %v878
      %v893 = vpack.c.b16 %v881, %v880
      %v894 = vpack.c.b16 %v883, %v882
      %v895 = vpack.c.b16 %v885, %v884
      %v896 = vpack.c.b16 %v887, %v886
      %v897 = vpack.c.b16 %v889, %v888
      %906 = vmatprep.subr.bf16.mxu0 0
      %907 = vmatpush1.bf16.msra.mxu0 %v897
      %908 = vmatprep.subr.bf16.mxu0 0
      %909 = vmatpush1.bf16.msra.mxu0 %v896
      %910 = vmatprep.subr.bf16.mxu0 0
      %911 = vmatpush1.bf16.msra.mxu0 %v895
      %912 = vmatprep.subr.bf16.mxu0 0
      %913 = vmatpush1.bf16.msra.mxu0 %v894
      %914 = vmatprep.subr.bf16.mxu0 0
      %915 = vmatpush1.bf16.msra.mxu0 %v893
      %916 = vmatprep.subr.bf16.mxu0 0
      %917 = vmatpush1.bf16.msra.mxu0 %v892
      %918 = vmatprep.subr.bf16.mxu0 0
      %919 = vmatpush1.bf16.msra.mxu0 %v891
      %920 = vmatprep.subr.bf16.mxu0 0
      %921 = vmatpush1.bf16.msra.mxu0 %v890
      %922 = vmatprep.subr.bf16.mxu0 0
      %923 = vmatpush2.bf16.msra.mxu0 0
      %924 = vmatprep.subr.bf16.mxu0 0
      %925 = vmatpush2.bf16.msra.mxu0 0
      %926 = vmatprep.subr.bf16.mxu0 0
      %927 = vmatpush2.bf16.msra.mxu0 0
      %928 = vmatprep.subr.bf16.mxu0 0
      %929 = vmatpush2.bf16.msra.mxu0 0
      %930 = vmatprep.subr.bf16.mxu0 0
      %931 = vmatpush2.bf16.msra.mxu0 0
      %932 = vmatprep.subr.bf16.mxu0 0
      %933 = vmatpush2.bf16.msra.mxu0 0
      %934 = vmatprep.subr.bf16.mxu0 0
      %935 = vmatpush2.bf16.msra.mxu0 0
      %936 = vmatprep.subr.bf16.mxu0 0
      %937 = vmatpush2.bf16.msra.mxu0 0
      %938 = vmatprep.mubr.bf16.mxu0 0
      %939 = vmatmul.mubr.bf16.gmra.mxu0 %v834
      %v940 = vpop.f32.mrf.mxu0
      %v941 = vadd.f32 %v856, %v940
      %v942 = vpop.f32.mrf.mxu0
      %v943 = vpop.f32.mrf.mxu0
      %v944 = vadd.f32 %v856, %v943
      %v945 = vpop.f32.mrf.mxu0
      %946 = vmatprep.mubr.bf16.mxu0 0
      %947 = vmatmul.mubr.bf16.gmra.mxu0 %v835
      %v948 = vpop.f32.mrf.mxu0
      %v949 = vadd.f32 %v856, %v948
      %v950 = vpop.f32.mrf.mxu0
      %v951 = vpop.f32.mrf.mxu0
      %v952 = vadd.f32 %v856, %v951
      %v953 = vpop.f32.mrf.mxu0
      %954 = vdwg.mxu0
      %955 = vst [vmem:[%s405] sm:$0xff] %v941
      %956 = vst [vmem:[%s405 + $0x8] sm:$0xff] %v944
      %957 = vst [vmem:[%s405 + $0x10] sm:$0xff] %v949
      %958 = vst [vmem:[%s405 + $0x18] sm:$0xff] %v952
      %v959 = vld [vmem:[%s4] sm:$0xff]
      %v960 = vld [vmem:[%s4 + $0x8] sm:$0xff]
      %v961 = vld [vmem:[%s4 + $0x10] sm:$0xff]
      %v962 = vld [vmem:[%s4 + $0x18] sm:$0xff]
      %v963 = vld [vmem:[%s4 + $0x20] sm:$0xff]
      %v964 = vld [vmem:[%s4 + $0x28] sm:$0xff]
      %v965 = vld [vmem:[%s4 + $0x30] sm:$0xff]
      %v966 = vld [vmem:[%s4 + $0x38] sm:$0xff]
      %v967 = vld [vmem:[%s4 + $0x40] sm:$0xff]
      %v968 = vld [vmem:[%s4 + $0x48] sm:$0xff]
      %v969 = vld [vmem:[%s4 + $0x50] sm:$0xff]
      %v970 = vld [vmem:[%s4 + $0x58] sm:$0xff]
      %v971 = vld [vmem:[%s4 + $0x60] sm:$0xff]
      %v972 = vld [vmem:[%s4 + $0x68] sm:$0xff]
      %v973 = vld [vmem:[%s4 + $0x70] sm:$0xff]
      %v974 = vld [vmem:[%s4 + $0x78] sm:$0xff]
      %v975 = vld [vmem:[%s4 + $0x80] sm:$0xff]
      %v976 = vld [vmem:[%s4 + $0x88] sm:$0xff]
      %v977 = vld [vmem:[%s4 + $0x90] sm:$0xff]
      %v978 = vld [vmem:[%s4 + $0x98] sm:$0xff]
      %v979 = vld [vmem:[%s4 + $0xa0] sm:$0xff]
      %v980 = vld [vmem:[%s4 + $0xa8] sm:$0xff]
      %v981 = vld [vmem:[%s4 + $0xb0] sm:$0xff]
      %v982 = vld [vmem:[%s4 + $0xb8] sm:$0xff]
      %v983 = vld [vmem:[%s4 + $0xc0] sm:$0xff]
      %v984 = vld [vmem:[%s4 + $0xc8] sm:$0xff]
      %v985 = vld [vmem:[%s4 + $0xd0] sm:$0xff]
      %v986 = vld [vmem:[%s4 + $0xd8] sm:$0xff]
      %v987 = vld [vmem:[%s4 + $0xe0] sm:$0xff]
      %v988 = vld [vmem:[%s4 + $0xe8] sm:$0xff]
      %v989 = vld [vmem:[%s4 + $0xf0] sm:$0xff]
      %v990 = vld [vmem:[%s4 + $0xf8] sm:$0xff]
      %v1023 = vunpack.c.l.b16 %v959
      %v1024 = vunpack.c.h.b16 %v959
      %v1025 = vunpack.c.l.b16 %v960
      %v1026 = vunpack.c.h.b16 %v960
      %v1027 = vunpack.c.l.b16 %v961
      %v1028 = vunpack.c.h.b16 %v961
      %v1029 = vunpack.c.l.b16 %v962
      %v1030 = vunpack.c.h.b16 %v962
      %v1031 = vunpack.c.l.b16 %v963
      %v1032 = vunpack.c.h.b16 %v963
      %v1033 = vunpack.c.l.b16 %v964
      %v1034 = vunpack.c.h.b16 %v964
      %v1035 = vunpack.c.l.b16 %v965
      %v1036 = vunpack.c.h.b16 %v965
      %v1037 = vunpack.c.l.b16 %v966
      %v1038 = vunpack.c.h.b16 %v966
      %v1039 = vunpack.c.l.b16 %v967
      %v1040 = vunpack.c.h.b16 %v967
      %v1041 = vunpack.c.l.b16 %v968
      %v1042 = vunpack.c.h.b16 %v968
      %v1043 = vunpack.c.l.b16 %v969
      %v1044 = vunpack.c.h.b16 %v969
      %v1045 = vunpack.c.l.b16 %v970
      %v1046 = vunpack.c.h.b16 %v970
      %v1047 = vunpack.c.l.b16 %v971
      %v1048 = vunpack.c.h.b16 %v971
      %v1049 = vunpack.c.l.b16 %v972
      %v1050 = vunpack.c.h.b16 %v972
      %v1051 = vunpack.c.l.b16 %v973
      %v1052 = vunpack.c.h.b16 %v973
      %v1053 = vunpack.c.l.b16 %v974
      %v1054 = vunpack.c.h.b16 %v974
      %v1055 = vunpack.c.l.b16 %v975
      %v1056 = vunpack.c.h.b16 %v975
      %v1057 = vunpack.c.l.b16 %v976
      %v1058 = vunpack.c.h.b16 %v976
      %v1059 = vunpack.c.l.b16 %v977
      %v1060 = vunpack.c.h.b16 %v977
      %v1061 = vunpack.c.l.b16 %v978
      %v1062 = vunpack.c.h.b16 %v978
      %v1063 = vunpack.c.l.b16 %v979
      %v1064 = vunpack.c.h.b16 %v979
      %v1065 = vunpack.c.l.b16 %v980
      %v1066 = vunpack.c.h.b16 %v980
      %v1067 = vunpack.c.l.b16 %v981
      %v1068 = vunpack.c.h.b16 %v981
      %v1069 = vunpack.c.l.b16 %v982
      %v1070 = vunpack.c.h.b16 %v982
      %v1071 = vunpack.c.l.b16 %v983
      %v1072 = vunpack.c.h.b16 %v983
      %v1073 = vunpack.c.l.b16 %v984
      %v1074 = vunpack.c.h.b16 %v984
      %v1075 = vunpack.c.l.b16 %v985
      %v1076 = vunpack.c.h.b16 %v985
      %v1077 = vunpack.c.l.b16 %v986
      %v1078 = vunpack.c.h.b16 %v986
      %v1079 = vunpack.c.l.b16 %v987
      %v1080 = vunpack.c.h.b16 %v987
      %v1081 = vunpack.c.l.b16 %v988
      %v1082 = vunpack.c.h.b16 %v988
      %v1083 = vunpack.c.l.b16 %v989
      %v1084 = vunpack.c.h.b16 %v989
      %v1085 = vunpack.c.l.b16 %v990
      %v1086 = vunpack.c.h.b16 %v990
      %v1087 = vpack.c.b16 %v1027, %v1023
      %v1088 = vpack.c.b16 %v1028, %v1024
      %v1089 = vpack.c.b16 %v1029, %v1025
      %v1090 = vpack.c.b16 %v1030, %v1026
      %v1091 = vpack.c.b16 %v1035, %v1031
      %v1092 = vpack.c.b16 %v1036, %v1032
      %v1093 = vpack.c.b16 %v1037, %v1033
      %v1094 = vpack.c.b16 %v1038, %v1034
      %v1095 = vpack.c.b16 %v1043, %v1039
      %v1096 = vpack.c.b16 %v1044, %v1040
      %v1097 = vpack.c.b16 %v1045, %v1041
      %v1098 = vpack.c.b16 %v1046, %v1042
      %v1099 = vpack.c.b16 %v1051, %v1047
      %v1100 = vpack.c.b16 %v1052, %v1048
      %v1101 = vpack.c.b16 %v1053, %v1049
      %v1102 = vpack.c.b16 %v1054, %v1050
      %v1103 = vpack.c.b16 %v1059, %v1055
      %v1104 = vpack.c.b16 %v1060, %v1056
      %v1105 = vpack.c.b16 %v1061, %v1057
      %v1106 = vpack.c.b16 %v1062, %v1058
      %v1107 = vpack.c.b16 %v1067, %v1063
      %v1108 = vpack.c.b16 %v1068, %v1064
      %v1109 = vpack.c.b16 %v1069, %v1065
      %v1110 = vpack.c.b16 %v1070, %v1066
      %v1111 = vpack.c.b16 %v1075, %v1071
      %v1112 = vpack.c.b16 %v1076, %v1072
      %v1113 = vpack.c.b16 %v1077, %v1073
      %v1114 = vpack.c.b16 %v1078, %v1074
      %v1115 = vpack.c.b16 %v1083, %v1079
      %v1116 = vpack.c.b16 %v1084, %v1080
      %v1117 = vpack.c.b16 %v1085, %v1081
      %v1118 = vpack.c.b16 %v1086, %v1082
      %1151 = vmatprep.subr.bf16.mxu0 %v1116
      %1152 = vmatpush1.bf16.msra.mxu0 %v1115
      %1153 = vmatprep.subr.bf16.mxu0 %v1112
      %1154 = vmatpush1.bf16.msra.mxu0 %v1111
      %1155 = vmatprep.subr.bf16.mxu0 %v1108
      %1156 = vmatpush1.bf16.msra.mxu0 %v1107
      %1157 = vmatprep.subr.bf16.mxu0 %v1104
      %1158 = vmatpush1.bf16.msra.mxu0 %v1103
      %1159 = vmatprep.subr.bf16.mxu0 %v1100
      %1160 = vmatpush1.bf16.msra.mxu0 %v1099
      %1161 = vmatprep.subr.bf16.mxu0 %v1096
      %1162 = vmatpush1.bf16.msra.mxu0 %v1095
      %1163 = vmatprep.subr.bf16.mxu0 %v1092
      %1164 = vmatpush1.bf16.msra.mxu0 %v1091
      %1165 = vmatprep.subr.bf16.mxu0 %v1088
      %1166 = vmatpush1.bf16.msra.mxu0 %v1087
      %1167 = vmatprep.subr.bf16.mxu0 0
      %1168 = vmatpush2.bf16.msra.mxu0 0
      %1169 = vmatprep.subr.bf16.mxu0 0
      %1170 = vmatpush2.bf16.msra.mxu0 0
      %1171 = vmatprep.subr.bf16.mxu0 0
      %1172 = vmatpush2.bf16.msra.mxu0 0
      %1173 = vmatprep.subr.bf16.mxu0 0
      %1174 = vmatpush2.bf16.msra.mxu0 0
      %1175 = vmatprep.subr.bf16.mxu0 0
      %1176 = vmatpush2.bf16.msra.mxu0 0
      %1177 = vmatprep.subr.bf16.mxu0 0
      %1178 = vmatpush2.bf16.msra.mxu0 0
      %1179 = vmatprep.subr.bf16.mxu0 0
      %1180 = vmatpush2.bf16.msra.mxu0 0
      %1181 = vmatprep.subr.bf16.mxu0 0
      %1182 = vmatpush2.bf16.msra.mxu0 0
      %1183 = vmatprep.mubr.bf16.mxu0 0
      %1184 = vmatmul.mubr.bf16.gmra.mxu0 %v834
      %v1185 = vpop.f32.mrf.mxu0
      %v1186 = vadd.f32 0.0, %v1185
      %v1187 = vpop.f32.mrf.mxu0
      %v1188 = vadd.f32 0.0, %v1187
      %v1189 = vpop.f32.mrf.mxu0
      %v1190 = vadd.f32 0.0, %v1189
      %v1191 = vpop.f32.mrf.mxu0
      %v1192 = vadd.f32 0.0, %v1191
      %1193 = vmatprep.mubr.bf16.mxu0 0
      %1194 = vmatmul.mubr.bf16.gmra.mxu0 %v835
      %v1195 = vpop.f32.mrf.mxu0
      %v1196 = vadd.f32 0.0, %v1195
      %v1197 = vpop.f32.mrf.mxu0
      %v1198 = vadd.f32 0.0, %v1197
      %v1199 = vpop.f32.mrf.mxu0
      %v1200 = vadd.f32 0.0, %v1199
      %v1201 = vpop.f32.mrf.mxu0
      %v1202 = vadd.f32 0.0, %v1201
      %1203 = vdwg.mxu0
      %1204 = vmatprep.subr.bf16.mxu0 %v1118
      %1205 = vmatpush1.bf16.msra.mxu0 %v1117
      %1206 = vmatprep.subr.bf16.mxu0 %v1114
      %1207 = vmatpush1.bf16.msra.mxu0 %v1113
      %1208 = vmatprep.subr.bf16.mxu0 %v1110
      %1209 = vmatpush1.bf16.msra.mxu0 %v1109
      %1210 = vmatprep.subr.bf16.mxu0 %v1106
      %1211 = vmatpush1.bf16.msra.mxu0 %v1105
      %1212 = vmatprep.subr.bf16.mxu0 %v1102
      %1213 = vmatpush1.bf16.msra.mxu0 %v1101
      %1214 = vmatprep.subr.bf16.mxu0 %v1098
      %1215 = vmatpush1.bf16.msra.mxu0 %v1097
      %1216 = vmatprep.subr.bf16.mxu0 %v1094
      %1217 = vmatpush1.bf16.msra.mxu0 %v1093
      %1218 = vmatprep.subr.bf16.mxu0 %v1090
      %1219 = vmatpush1.bf16.msra.mxu0 %v1089
      %1220 = vmatprep.subr.bf16.mxu0 0
      %1221 = vmatpush2.bf16.msra.mxu0 0
      %1222 = vmatprep.subr.bf16.mxu0 0
      %1223 = vmatpush2.bf16.msra.mxu0 0
      %1224 = vmatprep.subr.bf16.mxu0 0
      %1225 = vmatpush2.bf16.msra.mxu0 0
      %1226 = vmatprep.subr.bf16.mxu0 0
      %1227 = vmatpush2.bf16.msra.mxu0 0
      %1228 = vmatprep.subr.bf16.mxu0 0
      %1229 = vmatpush2.bf16.msra.mxu0 0
      %1230 = vmatprep.subr.bf16.mxu0 0
      %1231 = vmatpush2.bf16.msra.mxu0 0
      %1232 = vmatprep.subr.bf16.mxu0 0
      %1233 = vmatpush2.bf16.msra.mxu0 0
      %1234 = vmatprep.subr.bf16.mxu0 0
      %1235 = vmatpush2.bf16.msra.mxu0 0
      %1236 = vmatprep.mubr.bf16.mxu0 0
      %1237 = vmatmul.mubr.bf16.gmra.mxu0 %v834
      %v1238 = vpop.f32.mrf.mxu0
      %v1239 = vadd.f32 0.0, %v1238
      %v1240 = vpop.f32.mrf.mxu0
      %v1241 = vadd.f32 0.0, %v1240
      %v1242 = vpop.f32.mrf.mxu0
      %v1243 = vadd.f32 0.0, %v1242
      %v1244 = vpop.f32.mrf.mxu0
      %v1245 = vadd.f32 0.0, %v1244
      %1246 = vmatprep.mubr.bf16.mxu0 0
      %1247 = vmatmul.mubr.bf16.gmra.mxu0 %v835
      %v1248 = vpop.f32.mrf.mxu0
      %v1249 = vadd.f32 0.0, %v1248
      %v1250 = vpop.f32.mrf.mxu0
      %v1251 = vadd.f32 0.0, %v1250
      %v1252 = vpop.f32.mrf.mxu0
      %v1253 = vadd.f32 0.0, %v1252
      %v1254 = vpop.f32.mrf.mxu0
      %v1255 = vadd.f32 0.0, %v1254
      %1256 = vdwg.mxu0
      %v1257 = vadd.f32 %v1186, %v1188
      %v1258 = vadd.f32 %v1257, %v1239
      %v1259 = vadd.f32 %v1258, %v1241
      %1260 = vadd.xlane.f32.xlu0 %v1259
      %v1261 = vpop.xlane.xlu0 %1260
      %v1262 = vadd.f32 %v1190, %v1192
      %v1263 = vadd.f32 %v1262, %v1243
      %v1264 = vadd.f32 %v1263, %v1245
      %1265 = vadd.xlane.f32.xlu0 %v1264
      %v1266 = vpop.xlane.xlu0 %1265
      %v1267 = vadd.f32 %v1196, %v1198
      %v1268 = vadd.f32 %v1267, %v1249
      %v1269 = vadd.f32 %v1268, %v1251
      %1270 = vadd.xlane.f32.xlu0 %v1269
      %v1271 = vpop.xlane.xlu0 %1270
      %v1272 = vadd.f32 %v1200, %v1202
      %v1273 = vadd.f32 %v1272, %v1253
      %v1274 = vadd.f32 %v1273, %v1255
      %1275 = vadd.xlane.f32.xlu0 %v1274
      %v1276 = vpop.xlane.xlu0 %1275
      %v1277 = vrcp.pop 512.0
      %v1278 = vmul.f32 %v1261, %v1277
      %v1279 = vmul.f32 %v1266, %v1277
      %v1280 = vmul.f32 %v1271, %v1277
      %v1281 = vmul.f32 %v1276, %v1277
      %v1282 = vsub.f32 %v1186, %v1278
      %v1283 = vsub.f32 %v1188, %v1278
      %v1284 = vsub.f32 %v1239, %v1278
      %v1285 = vsub.f32 %v1241, %v1278
      %v1286 = vsub.f32 %v1190, %v1279
      %v1287 = vsub.f32 %v1192, %v1279
      %v1288 = vsub.f32 %v1243, %v1279
      %v1289 = vsub.f32 %v1245, %v1279
      %v1290 = vsub.f32 %v1196, %v1280
      %v1291 = vsub.f32 %v1198, %v1280
      %v1292 = vsub.f32 %v1249, %v1280
      %v1293 = vsub.f32 %v1251, %v1280
      %v1294 = vsub.f32 %v1200, %v1281
      %v1295 = vsub.f32 %v1202, %v1281
      %v1296 = vsub.f32 %v1253, %v1281
      %v1297 = vsub.f32 %v1255, %v1281
      %v1298 = vmul.f32 %v1282, %v1282
      %v1299 = vmul.f32 %v1283, %v1283
      %v1300 = vmul.f32 %v1284, %v1284
      %v1301 = vmul.f32 %v1285, %v1285
      %v1302 = vmul.f32 %v1286, %v1286
      %v1303 = vmul.f32 %v1287, %v1287
      %v1304 = vmul.f32 %v1288, %v1288
      %v1305 = vmul.f32 %v1289, %v1289
      %v1306 = vmul.f32 %v1290, %v1290
      %v1307 = vmul.f32 %v1291, %v1291
      %v1308 = vmul.f32 %v1292, %v1292
      %v1309 = vmul.f32 %v1293, %v1293
      %v1310 = vmul.f32 %v1294, %v1294
      %v1311 = vmul.f32 %v1295, %v1295
      %v1312 = vmul.f32 %v1296, %v1296
      %v1313 = vmul.f32 %v1297, %v1297
      %v1314 = vadd.f32 %v1298, %v1299
      %v1315 = vadd.f32 %v1314, %v1300
      %v1316 = vadd.f32 %v1315, %v1301
      %1317 = vadd.xlane.f32.xlu0 %v1316
      %v1318 = vpop.xlane.xlu0 %1317
      %v1319 = vadd.f32 %v1302, %v1303
      %v1320 = vadd.f32 %v1319, %v1304
      %v1321 = vadd.f32 %v1320, %v1305
      %1322 = vadd.xlane.f32.xlu0 %v1321
      %v1323 = vpop.xlane.xlu0 %1322
      %v1324 = vadd.f32 %v1306, %v1307
      %v1325 = vadd.f32 %v1324, %v1308
      %v1326 = vadd.f32 %v1325, %v1309
      %1327 = vadd.xlane.f32.xlu0 %v1326
      %v1328 = vpop.xlane.xlu0 %1327
      %v1329 = vadd.f32 %v1310, %v1311
      %v1330 = vadd.f32 %v1329, %v1312
      %v1331 = vadd.f32 %v1330, %v1313
      %1332 = vadd.xlane.f32.xlu0 %v1331
      %v1333 = vpop.xlane.xlu0 %1332
      %v1334 = vmul.f32 %v1318, %v1277
      %v1335 = vmul.f32 %v1323, %v1277
      %v1336 = vmul.f32 %v1328, %v1277
      %v1337 = vmul.f32 %v1333, %v1277
      %v1338 = vadd.f32 %v1334, 1e-05
      %v1339 = vadd.f32 %v1335, 1e-05
      %v1340 = vadd.f32 %v1336, 1e-05
      %v1341 = vadd.f32 %v1337, 1e-05
      %v1342 = vrsqrt.pop %v1338
      %v1343 = vrsqrt.pop %v1339
      %v1344 = vrsqrt.pop %v1340
      %v1345 = vrsqrt.pop %v1341
      %v1346 = vmul.f32 %v1282, %v1342
      %v1347 = vmul.f32 %v1283, %v1342
      %v1348 = vmul.f32 %v1284, %v1342
      %v1349 = vmul.f32 %v1285, %v1342
      %v1350 = vmul.f32 %v1286, %v1343
      %v1351 = vmul.f32 %v1287, %v1343
      %v1352 = vmul.f32 %v1288, %v1343
      %v1353 = vmul.f32 %v1289, %v1343
      %v1354 = vmul.f32 %v1290, %v1344
      %v1355 = vmul.f32 %v1291, %v1344
      %v1356 = vmul.f32 %v1292, %v1344
      %v1357 = vmul.f32 %v1293, %v1344
      %v1358 = vmul.f32 %v1294, %v1345
      %v1359 = vmul.f32 %v1295, %v1345
      %v1360 = vmul.f32 %v1296, %v1345
      %v1361 = vmul.f32 %v1297, %v1345
      %v1363 = vlaneseq
      %v1364 = vshrl.u32 %v1363, 7
      %v1365 = vsub.s32 0, %v1364
      %v1366 = vrot.slane %v417, %v1365
      %v1367 = vlaneseq
      %v1368 = vshrl.u32 %v1367, 7
      %v1369 = vsub.s32 1, %v1368
      %v1370 = vrot.slane %v417, %v1369
      %v1371 = vlaneseq
      %v1372 = vshrl.u32 %v1371, 7
      %v1373 = vsub.s32 2, %v1372
      %v1374 = vrot.slane %v417, %v1373
      %v1375 = vlaneseq
      %v1376 = vshrl.u32 %v1375, 7
      %v1377 = vsub.s32 3, %v1376
      %v1378 = vrot.slane %v417, %v1377
      %v1383 = vmul.f32 %v1346, %v1366
      %v1384 = vmul.f32 %v1347, %v1370
      %v1385 = vmul.f32 %v1348, %v1374
      %v1386 = vmul.f32 %v1349, %v1378
      %v1387 = vmul.f32 %v1350, %v1366
      %v1388 = vmul.f32 %v1351, %v1370
      %v1389 = vmul.f32 %v1352, %v1374
      %v1390 = vmul.f32 %v1353, %v1378
      %v1391 = vmul.f32 %v1354, %v1366
      %v1392 = vmul.f32 %v1355, %v1370
      %v1393 = vmul.f32 %v1356, %v1374
      %v1394 = vmul.f32 %v1357, %v1378
      %v1395 = vmul.f32 %v1358, %v1366
      %v1396 = vmul.f32 %v1359, %v1370
      %v1397 = vmul.f32 %v1360, %v1374
      %v1398 = vmul.f32 %v1361, %v1378
      %v1400 = vlaneseq
      %v1401 = vshrl.u32 %v1400, 7
      %v1402 = vsub.s32 0, %v1401
      %v1403 = vrot.slane %v418, %v1402
      %v1404 = vlaneseq
      %v1405 = vshrl.u32 %v1404, 7
      %v1406 = vsub.s32 1, %v1405
      %v1407 = vrot.slane %v418, %v1406
      %v1408 = vlaneseq
      %v1409 = vshrl.u32 %v1408, 7
      %v1410 = vsub.s32 2, %v1409
      %v1411 = vrot.slane %v418, %v1410
      %v1412 = vlaneseq
      %v1413 = vshrl.u32 %v1412, 7
      %v1414 = vsub.s32 3, %v1413
      %v1415 = vrot.slane %v418, %v1414
      %v1420 = vadd.f32 %v1383, %v1403
      %v1421 = vadd.f32 %v1384, %v1407
      %v1422 = vadd.f32 %v1385, %v1411
      %v1423 = vadd.f32 %v1386, %v1415
      %v1424 = vadd.f32 %v1387, %v1403
      %v1425 = vadd.f32 %v1388, %v1407
      %v1426 = vadd.f32 %v1389, %v1411
      %v1427 = vadd.f32 %v1390, %v1415
      %v1428 = vadd.f32 %v1391, %v1403
      %v1429 = vadd.f32 %v1392, %v1407
      %v1430 = vadd.f32 %v1393, %v1411
      %v1431 = vadd.f32 %v1394, %v1415
      %v1432 = vadd.f32 %v1395, %v1403
      %v1433 = vadd.f32 %v1396, %v1407
      %v1434 = vadd.f32 %v1397, %v1411
      %v1435 = vadd.f32 %v1398, %v1415
      %v1436 = vmax.f32 %v1420, 0.0
      %v1437 = vmax.f32 %v1421, 0.0
      %v1438 = vmax.f32 %v1422, 0.0
      %v1439 = vmax.f32 %v1423, 0.0
      %v1440 = vmax.f32 %v1424, 0.0
      %v1441 = vmax.f32 %v1425, 0.0
      %v1442 = vmax.f32 %v1426, 0.0
      %v1443 = vmax.f32 %v1427, 0.0
      %v1444 = vmax.f32 %v1428, 0.0
      %v1445 = vmax.f32 %v1429, 0.0
      %v1446 = vmax.f32 %v1430, 0.0
      %v1447 = vmax.f32 %v1431, 0.0
      %v1448 = vmax.f32 %v1432, 0.0
      %v1449 = vmax.f32 %v1433, 0.0
      %v1450 = vmax.f32 %v1434, 0.0
      %v1451 = vmax.f32 %v1435, 0.0
      %v1452 = vpack.c.bf16 %v1440, %v1436
      %v1453 = vpack.c.bf16 %v1441, %v1437
      %v1454 = vpack.c.bf16 %v1442, %v1438
      %v1455 = vpack.c.bf16 %v1443, %v1439
      %v1456 = vpack.c.bf16 %v1448, %v1444
      %v1457 = vpack.c.bf16 %v1449, %v1445
      %v1458 = vpack.c.bf16 %v1450, %v1446
      %v1459 = vpack.c.bf16 %v1451, %v1447
      %v1460 = vld [vmem:[%s5] sm:$0xf]
      %v1461 = vld [vmem:[%s5 + $0x4] sm:$0xf]
      %v1462 = vld [vmem:[%s5 + $0x8] sm:$0xf]
      %v1463 = vld [vmem:[%s5 + $0xc] sm:$0xf]
      %v1464 = vld [vmem:[%s5 + $0x10] sm:$0xf]
      %v1465 = vld [vmem:[%s5 + $0x14] sm:$0xf]
      %v1466 = vld [vmem:[%s5 + $0x18] sm:$0xf]
      %v1467 = vld [vmem:[%s5 + $0x1c] sm:$0xf]
      %v1468 = vld [vmem:[%s5 + $0x20] sm:$0xf]
      %v1469 = vld [vmem:[%s5 + $0x24] sm:$0xf]
      %v1470 = vld [vmem:[%s5 + $0x28] sm:$0xf]
      %v1471 = vld [vmem:[%s5 + $0x2c] sm:$0xf]
      %v1472 = vld [vmem:[%s5 + $0x30] sm:$0xf]
      %v1473 = vld [vmem:[%s5 + $0x34] sm:$0xf]
      %v1474 = vld [vmem:[%s5 + $0x38] sm:$0xf]
      %v1475 = vld [vmem:[%s5 + $0x3c] sm:$0xf]
      %v1476 = vld [vmem:[%s5 + $0x40] sm:$0xf]
      %v1477 = vld [vmem:[%s5 + $0x44] sm:$0xf]
      %v1478 = vld [vmem:[%s5 + $0x48] sm:$0xf]
      %v1479 = vld [vmem:[%s5 + $0x4c] sm:$0xf]
      %v1480 = vld [vmem:[%s5 + $0x50] sm:$0xf]
      %v1481 = vld [vmem:[%s5 + $0x54] sm:$0xf]
      %v1482 = vld [vmem:[%s5 + $0x58] sm:$0xf]
      %v1483 = vld [vmem:[%s5 + $0x5c] sm:$0xf]
      %v1484 = vld [vmem:[%s5 + $0x60] sm:$0xf]
      %v1485 = vld [vmem:[%s5 + $0x64] sm:$0xf]
      %v1486 = vld [vmem:[%s5 + $0x68] sm:$0xf]
      %v1487 = vld [vmem:[%s5 + $0x6c] sm:$0xf]
      %v1488 = vld [vmem:[%s5 + $0x70] sm:$0xf]
      %v1489 = vld [vmem:[%s5 + $0x74] sm:$0xf]
      %v1490 = vld [vmem:[%s5 + $0x78] sm:$0xf]
      %v1491 = vld [vmem:[%s5 + $0x7c] sm:$0xf]
      %v1492 = vld [vmem:[%s5 + $0x80] sm:$0xf]
      %v1493 = vld [vmem:[%s5 + $0x84] sm:$0xf]
      %v1494 = vld [vmem:[%s5 + $0x88] sm:$0xf]
      %v1495 = vld [vmem:[%s5 + $0x8c] sm:$0xf]
      %v1496 = vld [vmem:[%s5 + $0x90] sm:$0xf]
      %v1497 = vld [vmem:[%s5 + $0x94] sm:$0xf]
      %v1498 = vld [vmem:[%s5 + $0x98] sm:$0xf]
      %v1499 = vld [vmem:[%s5 + $0x9c] sm:$0xf]
      %v1500 = vld [vmem:[%s5 + $0xa0] sm:$0xf]
      %v1501 = vld [vmem:[%s5 + $0xa4] sm:$0xf]
      %v1502 = vld [vmem:[%s5 + $0xa8] sm:$0xf]
      %v1503 = vld [vmem:[%s5 + $0xac] sm:$0xf]
      %v1504 = vld [vmem:[%s5 + $0xb0] sm:$0xf]
      %v1505 = vld [vmem:[%s5 + $0xb4] sm:$0xf]
      %v1506 = vld [vmem:[%s5 + $0xb8] sm:$0xf]
      %v1507 = vld [vmem:[%s5 + $0xbc] sm:$0xf]
      %v1508 = vld [vmem:[%s5 + $0xc0] sm:$0xf]
      %v1509 = vld [vmem:[%s5 + $0xc4] sm:$0xf]
      %v1510 = vld [vmem:[%s5 + $0xc8] sm:$0xf]
      %v1511 = vld [vmem:[%s5 + $0xcc] sm:$0xf]
      %v1512 = vld [vmem:[%s5 + $0xd0] sm:$0xf]
      %v1513 = vld [vmem:[%s5 + $0xd4] sm:$0xf]
      %v1514 = vld [vmem:[%s5 + $0xd8] sm:$0xf]
      %v1515 = vld [vmem:[%s5 + $0xdc] sm:$0xf]
      %v1516 = vld [vmem:[%s5 + $0xe0] sm:$0xf]
      %v1517 = vld [vmem:[%s5 + $0xe4] sm:$0xf]
      %v1518 = vld [vmem:[%s5 + $0xe8] sm:$0xf]
      %v1519 = vld [vmem:[%s5 + $0xec] sm:$0xf]
      %v1520 = vld [vmem:[%s5 + $0xf0] sm:$0xf]
      %v1521 = vld [vmem:[%s5 + $0xf4] sm:$0xf]
      %v1522 = vld [vmem:[%s5 + $0xf8] sm:$0xf]
      %v1523 = vld [vmem:[%s5 + $0xfc] sm:$0xf]
      %v1588 = vunpack.c.l.b16 %v1460
      %v1589 = vunpack.c.l.b16 %v1461
      %v1590 = vunpack.c.l.b16 %v1462
      %v1591 = vunpack.c.l.b16 %v1463
      %v1592 = vunpack.c.l.b16 %v1464
      %v1593 = vunpack.c.l.b16 %v1465
      %v1594 = vunpack.c.l.b16 %v1466
      %v1595 = vunpack.c.l.b16 %v1467
      %v1596 = vunpack.c.l.b16 %v1468
      %v1597 = vunpack.c.l.b16 %v1469
      %v1598 = vunpack.c.l.b16 %v1470
      %v1599 = vunpack.c.l.b16 %v1471
      %v1600 = vunpack.c.l.b16 %v1472
      %v1601 = vunpack.c.l.b16 %v1473
      %v1602 = vunpack.c.l.b16 %v1474
      %v1603 = vunpack.c.l.b16 %v1475
      %v1604 = vunpack.c.l.b16 %v1476
      %v1605 = vunpack.c.l.b16 %v1477
      %v1606 = vunpack.c.l.b16 %v1478
      %v1607 = vunpack.c.l.b16 %v1479
      %v1608 = vunpack.c.l.b16 %v1480
      %v1609 = vunpack.c.l.b16 %v1481
      %v1610 = vunpack.c.l.b16 %v1482
      %v1611 = vunpack.c.l.b16 %v1483
      %v1612 = vunpack.c.l.b16 %v1484
      %v1613 = vunpack.c.l.b16 %v1485
      %v1614 = vunpack.c.l.b16 %v1486
      %v1615 = vunpack.c.l.b16 %v1487
      %v1616 = vunpack.c.l.b16 %v1488
      %v1617 = vunpack.c.l.b16 %v1489
      %v1618 = vunpack.c.l.b16 %v1490
      %v1619 = vunpack.c.l.b16 %v1491
      %v1620 = vunpack.c.l.b16 %v1492
      %v1621 = vunpack.c.l.b16 %v1493
      %v1622 = vunpack.c.l.b16 %v1494
      %v1623 = vunpack.c.l.b16 %v1495
      %v1624 = vunpack.c.l.b16 %v1496
      %v1625 = vunpack.c.l.b16 %v1497
      %v1626 = vunpack.c.l.b16 %v1498
      %v1627 = vunpack.c.l.b16 %v1499
      %v1628 = vunpack.c.l.b16 %v1500
      %v1629 = vunpack.c.l.b16 %v1501
      %v1630 = vunpack.c.l.b16 %v1502
      %v1631 = vunpack.c.l.b16 %v1503
      %v1632 = vunpack.c.l.b16 %v1504
      %v1633 = vunpack.c.l.b16 %v1505
      %v1634 = vunpack.c.l.b16 %v1506
      %v1635 = vunpack.c.l.b16 %v1507
      %v1636 = vunpack.c.l.b16 %v1508
      %v1637 = vunpack.c.l.b16 %v1509
      %v1638 = vunpack.c.l.b16 %v1510
      %v1639 = vunpack.c.l.b16 %v1511
      %v1640 = vunpack.c.l.b16 %v1512
      %v1641 = vunpack.c.l.b16 %v1513
      %v1642 = vunpack.c.l.b16 %v1514
      %v1643 = vunpack.c.l.b16 %v1515
      %v1644 = vunpack.c.l.b16 %v1516
      %v1645 = vunpack.c.l.b16 %v1517
      %v1646 = vunpack.c.l.b16 %v1518
      %v1647 = vunpack.c.l.b16 %v1519
      %v1648 = vunpack.c.l.b16 %v1520
      %v1649 = vunpack.c.l.b16 %v1521
      %v1650 = vunpack.c.l.b16 %v1522
      %v1651 = vunpack.c.l.b16 %v1523
      %v1652 = vpack.c.b16 %v1589, %v1588
      %v1653 = vpack.c.b16 %v1591, %v1590
      %v1654 = vpack.c.b16 %v1593, %v1592
      %v1655 = vpack.c.b16 %v1595, %v1594
      %v1656 = vpack.c.b16 %v1597, %v1596
      %v1657 = vpack.c.b16 %v1599, %v1598
      %v1658 = vpack.c.b16 %v1601, %v1600
      %v1659 = vpack.c.b16 %v1603, %v1602
      %v1660 = vpack.c.b16 %v1605, %v1604
      %v1661 = vpack.c.b16 %v1607, %v1606
      %v1662 = vpack.c.b16 %v1609, %v1608
      %v1663 = vpack.c.b16 %v1611, %v1610
      %v1664 = vpack.c.b16 %v1613, %v1612
      %v1665 = vpack.c.b16 %v1615, %v1614
      %v1666 = vpack.c.b16 %v1617, %v1616
      %v1667 = vpack.c.b16 %v1619, %v1618
      %v1668 = vpack.c.b16 %v1621, %v1620
      %v1669 = vpack.c.b16 %v1623, %v1622
      %v1670 = vpack.c.b16 %v1625, %v1624
      %v1671 = vpack.c.b16 %v1627, %v1626
      %v1672 = vpack.c.b16 %v1629, %v1628
      %v1673 = vpack.c.b16 %v1631, %v1630
      %v1674 = vpack.c.b16 %v1633, %v1632
      %v1675 = vpack.c.b16 %v1635, %v1634
      %v1676 = vpack.c.b16 %v1637, %v1636
      %v1677 = vpack.c.b16 %v1639, %v1638
      %v1678 = vpack.c.b16 %v1641, %v1640
      %v1679 = vpack.c.b16 %v1643, %v1642
      %v1680 = vpack.c.b16 %v1645, %v1644
      %v1681 = vpack.c.b16 %v1647, %v1646
      %v1682 = vpack.c.b16 %v1649, %v1648
      %v1683 = vpack.c.b16 %v1651, %v1650
      %1716 = vmatprep.subr.bf16.mxu0 0
      %1717 = vmatpush1.bf16.msra.mxu0 %v1659
      %1718 = vmatprep.subr.bf16.mxu0 0
      %1719 = vmatpush1.bf16.msra.mxu0 %v1658
      %1720 = vmatprep.subr.bf16.mxu0 0
      %1721 = vmatpush1.bf16.msra.mxu0 %v1657
      %1722 = vmatprep.subr.bf16.mxu0 0
      %1723 = vmatpush1.bf16.msra.mxu0 %v1656
      %1724 = vmatprep.subr.bf16.mxu0 0
      %1725 = vmatpush1.bf16.msra.mxu0 %v1655
      %1726 = vmatprep.subr.bf16.mxu0 0
      %1727 = vmatpush1.bf16.msra.mxu0 %v1654
      %1728 = vmatprep.subr.bf16.mxu0 0
      %1729 = vmatpush1.bf16.msra.mxu0 %v1653
      %1730 = vmatprep.subr.bf16.mxu0 0
      %1731 = vmatpush1.bf16.msra.mxu0 %v1652
      %1732 = vmatprep.subr.bf16.mxu0 0
      %1733 = vmatpush2.bf16.msra.mxu0 %v1667
      %1734 = vmatprep.subr.bf16.mxu0 0
      %1735 = vmatpush2.bf16.msra.mxu0 %v1666
      %1736 = vmatprep.subr.bf16.mxu0 0
      %1737 = vmatpush2.bf16.msra.mxu0 %v1665
      %1738 = vmatprep.subr.bf16.mxu0 0
      %1739 = vmatpush2.bf16.msra.mxu0 %v1664
      %1740 = vmatprep.subr.bf16.mxu0 0
      %1741 = vmatpush2.bf16.msra.mxu0 %v1663
      %1742 = vmatprep.subr.bf16.mxu0 0
      %1743 = vmatpush2.bf16.msra.mxu0 %v1662
      %1744 = vmatprep.subr.bf16.mxu0 0
      %1745 = vmatpush2.bf16.msra.mxu0 %v1661
      %1746 = vmatprep.subr.bf16.mxu0 0
      %1747 = vmatpush2.bf16.msra.mxu0 %v1660
      %1748 = vmatprep.mubr.bf16.mxu0 %v1453
      %1749 = vmatmul.mubr.bf16.gmra.mxu0 %v1452
      %v1750 = vpop.f32.mrf.mxu0
      %v1751 = vadd.f32 0.0, %v1750
      %v1752 = vpop.f32.mrf.mxu0
      %v1753 = vpop.f32.mrf.mxu0
      %v1754 = vadd.f32 0.0, %v1753
      %v1755 = vpop.f32.mrf.mxu0
      %1756 = vmatprep.mubr.bf16.mxu0 %v1457
      %1757 = vmatmul.mubr.bf16.gmra.mxu0 %v1456
      %v1758 = vpop.f32.mrf.mxu0
      %v1759 = vadd.f32 0.0, %v1758
      %v1760 = vpop.f32.mrf.mxu0
      %v1761 = vpop.f32.mrf.mxu0
      %v1762 = vadd.f32 0.0, %v1761
      %v1763 = vpop.f32.mrf.mxu0
      %1764 = vdwg.mxu0
      %1765 = vmatprep.subr.bf16.mxu0 0
      %1766 = vmatpush1.bf16.msra.mxu0 %v1675
      %1767 = vmatprep.subr.bf16.mxu0 0
      %1768 = vmatpush1.bf16.msra.mxu0 %v1674
      %1769 = vmatprep.subr.bf16.mxu0 0
      %1770 = vmatpush1.bf16.msra.mxu0 %v1673
      %1771 = vmatprep.subr.bf16.mxu0 0
      %1772 = vmatpush1.bf16.msra.mxu0 %v1672
      %1773 = vmatprep.subr.bf16.mxu0 0
      %1774 = vmatpush1.bf16.msra.mxu0 %v1671
      %1775 = vmatprep.subr.bf16.mxu0 0
      %1776 = vmatpush1.bf16.msra.mxu0 %v1670
      %1777 = vmatprep.subr.bf16.mxu0 0
      %1778 = vmatpush1.bf16.msra.mxu0 %v1669
      %1779 = vmatprep.subr.bf16.mxu0 0
      %1780 = vmatpush1.bf16.msra.mxu0 %v1668
      %1781 = vmatprep.subr.bf16.mxu0 0
      %1782 = vmatpush2.bf16.msra.mxu0 %v1683
      %1783 = vmatprep.subr.bf16.mxu0 0
      %1784 = vmatpush2.bf16.msra.mxu0 %v1682
      %1785 = vmatprep.subr.bf16.mxu0 0
      %1786 = vmatpush2.bf16.msra.mxu0 %v1681
      %1787 = vmatprep.subr.bf16.mxu0 0
      %1788 = vmatpush2.bf16.msra.mxu0 %v1680
      %1789 = vmatprep.subr.bf16.mxu0 0
      %1790 = vmatpush2.bf16.msra.mxu0 %v1679
      %1791 = vmatprep.subr.bf16.mxu0 0
      %1792 = vmatpush2.bf16.msra.mxu0 %v1678
      %1793 = vmatprep.subr.bf16.mxu0 0
      %1794 = vmatpush2.bf16.msra.mxu0 %v1677
      %1795 = vmatprep.subr.bf16.mxu0 0
      %1796 = vmatpush2.bf16.msra.mxu0 %v1676
      %1797 = vmatprep.mubr.bf16.mxu0 %v1455
      %1798 = vmatmul.mubr.bf16.gmra.mxu0 %v1454
      %v1799 = vpop.f32.mrf.mxu0
      %v1800 = vadd.f32 %v1751, %v1799
      %v1801 = vpop.f32.mrf.mxu0
      %v1802 = vpop.f32.mrf.mxu0
      %v1803 = vadd.f32 %v1754, %v1802
      %v1804 = vpop.f32.mrf.mxu0
      %1805 = vmatprep.mubr.bf16.mxu0 %v1459
      %1806 = vmatmul.mubr.bf16.gmra.mxu0 %v1458
      %v1807 = vpop.f32.mrf.mxu0
      %v1808 = vadd.f32 %v1759, %v1807
      %v1809 = vpop.f32.mrf.mxu0
      %v1810 = vpop.f32.mrf.mxu0
      %v1811 = vadd.f32 %v1762, %v1810
      %v1812 = vpop.f32.mrf.mxu0
      %1813 = vdwg.mxu0
      %v1814 = vmul.f32 %v1800, %v1800
      %v1815 = vmul.f32 %v1803, %v1803
      %v1816 = vmul.f32 %v1808, %v1808
      %v1817 = vmul.f32 %v1811, %v1811
      %1818 = vadd.xlane.f32.xlu0 %v1814
      %v1819 = vpop.xlane.xlu0 %1818
      %1820 = vadd.xlane.f32.xlu0 %v1815
      %v1821 = vpop.xlane.xlu0 %1820
      %1822 = vadd.xlane.f32.xlu0 %v1816
      %v1823 = vpop.xlane.xlu0 %1822
      %1824 = vadd.xlane.f32.xlu0 %v1817
      %v1825 = vpop.xlane.xlu0 %1824
      %v1826 = vmax.f32 %v1819, 1e-24
      %v1827 = vmax.f32 %v1821, 1e-24
      %v1828 = vmax.f32 %v1823, 1e-24
      %v1829 = vmax.f32 %v1825, 1e-24
      %v1830 = vrsqrt.pop %v1826
      %v1831 = vrsqrt.pop %v1827
      %v1832 = vrsqrt.pop %v1828
      %v1833 = vrsqrt.pop %v1829
      %v1834 = vmul.f32 %v1800, %v1830
      %v1835 = vmul.f32 %v1803, %v1831
      %v1836 = vmul.f32 %v1808, %v1832
      %v1837 = vmul.f32 %v1811, %v1833
      %1838 = vst [vmem:[%s412] sm:$0xff] %v1834
      %1839 = vst [vmem:[%s412 + $0x8] sm:$0xff] %v1835
      %1840 = vst [vmem:[%s412 + $0x10] sm:$0xff] %v1836
      %1841 = vst [vmem:[%s412 + $0x18] sm:$0xff] %v1837
      %s1842 = smul.u32 2, %s22
      %p1843 = scmp.lt.s32.totalorder %s1842, 3
      %s1844 = scalar_select %p1843, %s1842, 3
      %s1845 = smul.addr %s1844, 2
      %s1846 = smul.addr %s1845, 8
      %s1847 = scalar_lea.vmem %s7, %s1846
      %s1848 = smul.u32 2, %s22
      %p1849 = scmp.lt.s32.totalorder %s1848, 3
      %s1850 = scalar_select %p1849, %s1848, 3
      %s1851 = smul.addr %s1850, 2
      %s1852 = smul.addr %s1851, 8
      %s1853 = scalar_lea.vmem %s8, %s1852
      %s1854 = smul.u32 2, %s22
      %p1855 = scmp.lt.s32.totalorder %s1854, 3
      %s1856 = scalar_select %p1855, %s1854, 3
      %s1857 = smul.addr %s1856, 2
      %s1858 = smul.addr %s1857, 8
      %s1859 = scalar_lea.vmem %s9, %s1858
      %s1860 = smul.u32 2, %s22
      %p1861 = scmp.lt.s32.totalorder %s1860, 3
      %s1862 = scalar_select %p1861, %s1860, 3
      %s1863 = smul.addr %s1862, 2
      %s1864 = smul.addr %s1863, 8
      %s1865 = scalar_lea.vmem %s10, %s1864
      // Predicated region
      $region49: #{model_forward.1} parent=47 // pred_check
        %p1866 = pneg %p192
      $region50: #{model_forward.1} parent=47 // pred_check_branch
        %1868 = sbr.rel (%p1866) target = $region52
      $region51: #{model_forward.1} parent=47 // pred_region
        %s1869 = smul.u32 2, %s22
      $region52: #{model_forward.1} parent=47 // pred_fallthru
        _
      // Predicated region
      $region53: #{model_forward.1} parent=47 // pred_check
        %p1870 = pneg %p218
      $region54: #{model_forward.1} parent=47 // pred_check_branch
        %1872 = sbr.rel (%p1870) target = $region56
      $region55: #{model_forward.1} parent=47 // pred_region
        %s1873 = smul.u32 2, %s22
      $region56: #{model_forward.1} parent=47 // pred_fallthru
        _
      // Predicated region
      $region57: #{model_forward.1} parent=47 // pred_check
        %p1874 = pneg %p244
      $region58: #{model_forward.1} parent=47 // pred_check_branch
        %1876 = sbr.rel (%p1874) target = $region60
      $region59: #{model_forward.1} parent=47 // pred_region
        %s1877 = smul.u32 2, %s22
      $region60: #{model_forward.1} parent=47 // pred_fallthru
        _
      // Predicated region
      $region61: #{model_forward.1} parent=47 // pred_check
        %p1878 = pneg %p270
      $region62: #{model_forward.1} parent=47 // pred_check_branch
        %1880 = sbr.rel (%p1878) target = $region64
      $region63: #{model_forward.1} parent=47 // pred_region
        %s1881 = smul.u32 2, %s22
      $region64: #{model_forward.1} parent=47 // pred_fallthru
        _
    $region48: #{model_forward.1} parent=5 // pred_fallthru
      _
    %p1882 = scmp.le.s32.totalorder 2, %s17
    // Predicated region
    $region65: #{model_forward.1} parent=5 // pred_check
      %p1883 = pneg %p1882
    $region66: #{model_forward.1} parent=5 // pred_check_branch
      %1885 = sbr.rel (%p1883) target = $region68
    $region67: #{model_forward.1} parent=5 // pred_region
      %s1886 = ssub.s32 %s17, 2
      // Predicated region
      $region69: #{model_forward.1} parent=67 // pred_check
        %p1887 = pneg %p198
      $region70: #{model_forward.1} parent=67 // pred_check_branch
        %1889 = sbr.rel (%p1887) target = $region72
      $region71: #{model_forward.1} parent=67 // pred_region
        %s1890 = smul.u32 2, %s23
        %p1891 = scmp.lt.s32.totalorder %s1890, 3
        %s1892 = scalar_select %p1891, %s1890, 3
        %s1893 = smul.addr %s1892, 2
        %s1894 = smul.addr %s1893, 8
        %s1895 = scalar_lea.vmem %s7, %s1894
      $region72: #{model_forward.1} parent=67 // pred_fallthru
        _
      // Predicated region
      $region73: #{model_forward.1} parent=67 // pred_check
        %p1896 = pneg %p224
      $region74: #{model_forward.1} parent=67 // pred_check_branch
        %1898 = sbr.rel (%p1896) target = $region76
      $region75: #{model_forward.1} parent=67 // pred_region
        %s1899 = smul.u32 2, %s23
        %p1900 = scmp.lt.s32.totalorder %s1899, 3
        %s1901 = scalar_select %p1900, %s1899, 3
        %s1902 = smul.addr %s1901, 2
        %s1903 = smul.addr %s1902, 8
        %s1904 = scalar_lea.vmem %s8, %s1903
      $region76: #{model_forward.1} parent=67 // pred_fallthru
        _
      // Predicated region
      $region77: #{model_forward.1} parent=67 // pred_check
        %p1905 = pneg %p250
      $region78: #{model_forward.1} parent=67 // pred_check_branch
        %1907 = sbr.rel (%p1905) target = $region80
      $region79: #{model_forward.1} parent=67 // pred_region
        %s1908 = smul.u32 2, %s23
        %p1909 = scmp.lt.s32.totalorder %s1908, 3
        %s1910 = scalar_select %p1909, %s1908, 3
        %s1911 = smul.addr %s1910, 2
        %s1912 = smul.addr %s1911, 8
        %s1913 = scalar_lea.vmem %s9, %s1912
      $region80: #{model_forward.1} parent=67 // pred_fallthru
        _
      // Predicated region
      $region81: #{model_forward.1} parent=67 // pred_check
        %p1914 = pneg %p276
      $region82: #{model_forward.1} parent=67 // pred_check_branch
        %1916 = sbr.rel (%p1914) target = $region84
      $region83: #{model_forward.1} parent=67 // pred_region
        %s1917 = smul.u32 2, %s23
        %p1918 = scmp.lt.s32.totalorder %s1917, 3
        %s1919 = scalar_select %p1918, %s1917, 3
        %s1920 = smul.addr %s1919, 2
        %s1921 = smul.addr %s1920, 8
        %s1922 = scalar_lea.vmem %s10, %s1921
      $region84: #{model_forward.1} parent=67 // pred_fallthru
        _
    $region68: #{model_forward.1} parent=5 // pred_fallthru
      _
  $region6: #{model_forward.1} parent=0 // loop_footer
    %s21 = sadd.s32 1, %s17
  $region7: #{model_forward.1} parent=0 // loop_footer_branch
    %16 = sbr.rel target = $region3
  $region8: #{model_forward.1} parent=0 // loop_exit
    _

</llo_original>
